<compile_context>
chip_gen: v7x
topology: tpu7x:2x2x1
jax: 0.10.0
libtpu: 0.0.40
codegen_flags: <defaults>
</compile_context>

<pallas_src>
import functools

import jax
import jax.numpy as jnp
from jax import lax
from jax.experimental import pallas as pl
from jax.experimental.pallas import tpu as pltpu


def _dot2(a, b):
    """Plain (M,K)x(K,N) MXU matmul with f32 accumulation."""
    return lax.dot_general(a, b, (((1,), (0,)), ((), ())),
                           preferred_element_type=jnp.float32)


def _lawin_attn_kernel(q_ref, ctx_ref, pmw_ref, pmb_ref, wth_ref, bth_ref,
                       wpg_ref, bpg_ref, wo_ref, bo_ref, o_ref):
    # q_ref/ctx_ref/o_ref: (tb, C, N)
    # pmw: (head, N, N) bf16, pmb: (head, 1, N) f32
    # wth: (IC, C) bf16, wpg: (2*IC, C) bf16 (phi stacked over g), wo: (C, IC) bf16
    # biases: (*, 1) f32 (BN folded into wo/bo)
    tb, C, N = q_ref.shape
    head = pmw_ref.shape[0]
    IC = wth_ref.shape[0]
    ch = C // head            # channels per head for position mixing
    dim = IC // head          # attention head dim
    scale = 1.0 / float(dim) ** 0.5
    f32 = jnp.float32
    bf16 = jnp.bfloat16

    def body(t, carry):
        q_t = q_ref[t].astype(f32)            # (C, N)
        ctx_t = ctx_ref[t].astype(f32)        # (C, N)

        # --- 1) per-head position mixing (head-batched dot over N) + residual ---
        ctx_hd = ctx_t.reshape(head, ch, N)
        mixed = lax.dot_general(
            ctx_hd.astype(bf16), pmw_ref[...],
            dimension_numbers=(((2,), (2,)), ((0,), (0,))),   # x @ W^T, per head
            preferred_element_type=f32)
        ctx2 = (ctx_hd + mixed + pmb_ref[...]).reshape(C, N)  # (C, N) f32

        # --- 2) 1x1 projections (channel-major, tb handled by the window loop) ---
        theta = _dot2(wth_ref[...], q_t.astype(bf16)) + bth_ref[...]     # (IC, N)
        pg = _dot2(wpg_ref[...], ctx2.astype(bf16)) + bpg_ref[...]       # (2*IC, N)

        theta_b = theta.astype(bf16)
        phi_b = pg[:IC].astype(bf16)
        g_b = pg[IC:].astype(bf16)

        # --- 3) multi-head non-local attention (channel-major, no transposes) ---
        ys = []
        for h in range(head):
            sl = slice(h * dim, (h + 1) * dim)
            s = lax.dot_general(theta_b[sl], phi_b[sl],
                                (((0,), (0,)), ((), ())),
                                preferred_element_type=f32) * scale      # (Nq, Nk)
            s = s - jnp.max(s, axis=-1, keepdims=True)
            e = jnp.exp(s)
            inv = pl.reciprocal(jnp.sum(e, axis=-1, keepdims=True), approx=True)
            p = (e * inv).astype(bf16)
            # y_h channel-major: (dim, Nq) = g_h (dim, Nk) contracted with p (Nq, Nk)
            ys.append(lax.dot_general(g_b[sl], p, (((1,), (1,)), ((), ())),
                                      preferred_element_type=f32))
        y = jnp.concatenate(ys, axis=0)                                  # (IC, N)

        # --- 4) conv_out (BN folded) + residual with query ---
        z = _dot2(wo_ref[...], y.astype(bf16)) + bo_ref[...]             # (C, N)
        o_ref[t] = (q_t + z).astype(o_ref.dtype)
        return carry

    lax.fori_loop(0, tb, body, 0)


def lawin_attn_forward(query, context, params, *, head=4, tb=8, eps=1e-5):
    """LawinAttn.forward (eval mode). query/context: (B, C, H, W) -> (B, C, H, W)."""
    B, C, H, W = query.shape
    N = H * W
    IC = params["w_g"].shape[0]
    assert C % head == 0 and IC % head == 0
    cdt = jnp.bfloat16   # MXU operand dtype (f32 accumulation inside the kernel)

    # Fold eval-mode BatchNorm into the (bias-free) conv_out.
    bn_scale = params["bn_gamma"] / jnp.sqrt(params["bn_var"] + eps)
    w_out = (params["w_out"] * bn_scale[:, None]).astype(cdt)                 # (C, IC)
    b_out = (params["bn_beta"] - params["bn_mean"] * bn_scale).reshape(C, 1)

    pm_w = params["pm_w"].astype(cdt)                                          # (head, N, N)
    pm_b = params["pm_b"].reshape(head, 1, N).astype(jnp.float32)
    w_th = params["w_theta"].astype(cdt)
    b_th = params["b_theta"].reshape(IC, 1).astype(jnp.float32)
    # Merge phi and g into one stacked projection.
    w_pg = jnp.concatenate([params["w_phi"], params["w_g"]], axis=0).astype(cdt)   # (2IC, C)
    b_pg = jnp.concatenate([params["b_phi"], params["b_g"]],
                           axis=0).reshape(2 * IC, 1).astype(jnp.float32)

    q = query.reshape(B, C, N)
    ctx = context.reshape(B, C, N)

    # Ragged batch: clamp tile, cdiv grid, zero padding (padded windows sliced off).
    tb = int(max(1, min(tb, B)))
    num_tiles = pl.cdiv(B, tb)
    Bp = num_tiles * tb
    if Bp != B:
        pad = ((0, Bp - B), (0, 0), (0, 0))
        q = jnp.pad(q, pad)
        ctx = jnp.pad(ctx, pad)

    dim = IC // head
    flops_per_win = 2 * (C * N * N                 # position mixing
                         + 3 * IC * C * N          # theta / phi / g projections
                         + 2 * head * dim * N * N  # attention (scores + PV)
                         + C * IC * N)             # conv_out
    weight_bytes = 2 * (head * N * N + 4 * IC * C) + 4 * (head * N + 3 * IC + 2 * C)
    cost = pl.CostEstimate(
        flops=int(Bp * flops_per_win),
        transcendentals=int(Bp * head * N * N),
        bytes_accessed=int(4 * 3 * Bp * C * N + weight_bytes),
    )

    win_spec = pl.BlockSpec((tb, C, N), lambda b: (b, 0, 0))

    def resident(shape):
        nd = len(shape)
        return pl.BlockSpec(shape, lambda b: (0,) * nd)

    out = pl.pallas_call(
        _lawin_attn_kernel,
        out_shape=jax.ShapeDtypeStruct((Bp, C, N), query.dtype),
        grid_spec=pltpu.PrefetchScalarGridSpec(
            num_scalar_prefetch=0,
            grid=(num_tiles,),
            in_specs=[
                win_spec,                                   # query windows
                win_spec,                                   # context windows
                resident((head, N, N)),                     # position-mixing weights
                resident((head, 1, N)),                     # position-mixing biases
                resident((IC, C)), resident((IC, 1)),       # theta
                resident((2 * IC, C)), resident((2 * IC, 1)),  # phi|g stacked
                resident((C, IC)), resident((C, 1)),        # conv_out (BN folded)
            ],
            out_specs=win_spec,
        ),
        compiler_params=pltpu.CompilerParams(
            dimension_semantics=("parallel",),
            vmem_limit_bytes=32 * 1024 * 1024,
        ),
        cost_estimate=cost,
    )(q, ctx, pm_w, pm_b, w_th, b_th, w_pg, b_pg, w_out, b_out)

    return out[:B].reshape(B, C, H, W)


def _reference_lawin_attn(query, context, params, *, head, eps=1e-5):
    """Plain-JAX transliteration of the PyTorch forward (eval mode), full precision."""
    B, C, H, W = context.shape
    N = H * W
    IC = params["w_g"].shape[0]
    dim = IC // head
    ch = C // head
    hp = lax.Precision.HIGHEST

    ctx = context.reshape(B, C, N)
    mixed = [
        jnp.einsum("bcn,mn->bcm", ctx[:, i * ch:(i + 1) * ch, :],
                   params["pm_w"][i], precision=hp)
        + params["pm_b"][i][None, None, :]
        for i in range(head)
    ]
    ctx = ctx + jnp.concatenate(mixed, axis=1)

    def conv1x1(x, w, b=None):
        y = jnp.einsum("oc,bcn->bon", w, x, precision=hp)
        if b is not None:
            y = y + b[None, :, None]
        return y

    g_x = conv1x1(ctx, params["w_g"], params["b_g"])
    theta_x = conv1x1(query.reshape(B, C, N), params["w_theta"], params["b_theta"])
    phi_x = conv1x1(ctx, params["w_phi"], params["b_phi"])

    def split_heads(x):  # 'b (h d) n -> (b h) d n'
        return x.reshape(B, head, dim, N).reshape(B * head, dim, N)

    g_x = jnp.transpose(split_heads(g_x), (0, 2, 1))        # (Bh, N, d)
    theta_x = jnp.transpose(split_heads(theta_x), (0, 2, 1))
    phi_x = split_heads(phi_x)                              # (Bh, d, N)

    pw = jnp.einsum("bnd,bdm->bnm", theta_x, phi_x, precision=hp) / (dim ** 0.5)
    pw = jax.nn.softmax(pw, axis=-1)
    y = jnp.einsum("bnm,bmd->bnd", pw, g_x, precision=hp)   # (Bh, N, d)
    y = y.reshape(B, head, N, dim).transpose(0, 2, 1, 3).reshape(B, N, IC)
    y = jnp.transpose(y, (0, 2, 1)).reshape(B, IC, H, W)

    z = jnp.einsum("oc,bchw->bohw", params["w_out"], y, precision=hp)
    z = (params["bn_gamma"][None, :, None, None]
         * (z - params["bn_mean"][None, :, None, None])
         / jnp.sqrt(params["bn_var"][None, :, None, None] + eps)
         + params["bn_beta"][None, :, None, None])
    return query + z


if __name__ == "__main__":
    # Small shapes consistent with the module: in_ch=64, head=4, patch_size=8,
    # reduction=2 -> inter_channels=32, N=64, spatial 8x8, 8 attention windows.
    B, in_ch, head, patch, reduction = 8, 64, 4, 8, 2
    H = W = patch
    N = patch * patch
    IC = max(in_ch // reduction, 1)
    eps = 1e-5

    keys = list(jax.random.split(jax.random.PRNGKey(0), 18))
    k = iter(keys)

    query = jax.random.normal(next(k), (B, in_ch, H, W), jnp.float32)
    context = jax.random.normal(next(k), (B, in_ch, H, W), jnp.float32)

    def lin_w(key, shape, fan_in):
        return jax.random.normal(key, shape, jnp.float32) * (fan_in ** -0.5)

    params = dict(
        pm_w=lin_w(next(k), (head, N, N), N),            # nn.Linear(N, N) per head, (out,in)
        pm_b=jax.random.normal(next(k), (head, N), jnp.float32) * 0.02,
        w_theta=lin_w(next(k), (IC, in_ch), in_ch),      # 1x1 conv weights, (out,in)
        b_theta=jax.random.normal(next(k), (IC,), jnp.float32) * 0.02,
        w_phi=lin_w(next(k), (IC, in_ch), in_ch),
        b_phi=jax.random.normal(next(k), (IC,), jnp.float32) * 0.02,
        w_g=lin_w(next(k), (IC, in_ch), in_ch),
        b_g=jax.random.normal(next(k), (IC,), jnp.float32) * 0.02,
        w_out=lin_w(next(k), (in_ch, IC), IC),           # conv_out (bias-free)
        bn_gamma=jax.random.uniform(next(k), (in_ch,), jnp.float32, 0.5, 1.5),
        bn_beta=jax.random.normal(next(k), (in_ch,), jnp.float32) * 0.1,
        bn_mean=jax.random.normal(next(k), (in_ch,), jnp.float32) * 0.1,
        bn_var=jax.random.uniform(next(k), (in_ch,), jnp.float32, 0.5, 1.5),
    )

    # tb=4 with B=8 -> 2 grid steps (keeps the parallel axis shardable on v7x).
    fwd = jax.jit(functools.partial(lawin_attn_forward, head=head, tb=4, eps=eps))
    out = jax.block_until_ready(fwd(query, context, params))

    ref = _reference_lawin_attn(query, context, params, head=head, eps=eps)
    assert out.shape == (B, in_ch, H, W)
    max_err = float(jnp.max(jnp.abs(out - ref)))
    mean_err = float(jnp.mean(jnp.abs(out - ref)))
    # bf16 MXU operands (f32 accumulation) -> bf16-appropriate tolerances.
    assert mean_err < 2.5e-2, f"mean abs err = {mean_err}"
    assert jnp.allclose(out, ref, atol=1e-1, rtol=5e-2), (
        f"max abs err = {max_err}, mean abs err = {mean_err}")

    print("KERNEL_OK")
</pallas_src>

<mosaic_0001>
module attributes {stable_mosaic.version = 11 : i64} {
  func.func @_lawin_attn_kernel(%arg0: i32, %arg1: memref<4x64x64xf32, #tpu.memory_space<vmem>>, %arg2: memref<4x64x64xf32, #tpu.memory_space<vmem>>, %arg3: memref<4x64x64xbf16, #tpu.memory_space<vmem>>, %arg4: memref<4x1x64xf32, #tpu.memory_space<vmem>>, %arg5: memref<32x64xbf16, #tpu.memory_space<vmem>>, %arg6: memref<32x1xf32, #tpu.memory_space<vmem>>, %arg7: memref<64x64xbf16, #tpu.memory_space<vmem>>, %arg8: memref<64x1xf32, #tpu.memory_space<vmem>>, %arg9: memref<64x32xbf16, #tpu.memory_space<vmem>>, %arg10: memref<64x1xf32, #tpu.memory_space<vmem>>, %arg11: memref<4x64x64xf32, #tpu.memory_space<vmem>>) attributes {dimension_semantics = [#tpu.dimension_semantics<parallel>], iteration_bounds = array<i64: 2>, scalar_prefetch = 0 : i64, scratch_operands = 0 : i64, tpu.core_type = #tpu.core_type<tc>, window_params = [{transform_indices = @transform_0, window_bounds = array<i64: 4, 64, 64>}, {transform_indices = @transform_1, window_bounds = array<i64: 4, 64, 64>}, {pipeline_mode = #tpu.pipeline_mode<synchronous>, transform_indices = @transform_2, window_bounds = array<i64: 4, 64, 64>}, {pipeline_mode = #tpu.pipeline_mode<synchronous>, transform_indices = @transform_3, window_bounds = array<i64: 4, 1, 64>}, {pipeline_mode = #tpu.pipeline_mode<synchronous>, transform_indices = @transform_4, window_bounds = array<i64: 32, 64>}, {pipeline_mode = #tpu.pipeline_mode<synchronous>, transform_indices = @transform_5, window_bounds = array<i64: 32, 1>}, {pipeline_mode = #tpu.pipeline_mode<synchronous>, transform_indices = @transform_6, window_bounds = array<i64: 64, 64>}, {pipeline_mode = #tpu.pipeline_mode<synchronous>, transform_indices = @transform_7, window_bounds = array<i64: 64, 1>}, {pipeline_mode = #tpu.pipeline_mode<synchronous>, transform_indices = @transform_8, window_bounds = array<i64: 64, 32>}, {pipeline_mode = #tpu.pipeline_mode<synchronous>, transform_indices = @transform_9, window_bounds = array<i64: 64, 1>}, {transform_indices = @transform_10, window_bounds = array<i64: 4, 64, 64>}]} {
    %c0_i32 = arith.constant 0 : i32
    %c4_i32 = arith.constant 4 : i32
    %0 = arith.addi %c0_i32, %c4_i32 : i32
    %c1_i32 = arith.constant 1 : i32
    scf.for %arg12 = %c0_i32 to %0 step %c1_i32  : i32 {
      %1 = arith.index_cast %arg12 : i32 to index
      %c0 = arith.constant 0 : index
      %c0_1 = arith.constant 0 : index
      %2 = vector.load %arg1[%1, %c0, %c0_1] : memref<4x64x64xf32, #tpu.memory_space<vmem>>, vector<1x64x64xf32>
      %3 = vector.shape_cast %2 : vector<1x64x64xf32> to vector<64x64xf32>
      %4 = arith.index_cast %arg12 : i32 to index
      %c0_2 = arith.constant 0 : index
      %c0_3 = arith.constant 0 : index
      %5 = vector.load %arg2[%4, %c0_2, %c0_3] : memref<4x64x64xf32, #tpu.memory_space<vmem>>, vector<1x64x64xf32>
      %6 = vector.shape_cast %5 : vector<1x64x64xf32> to vector<64x64xf32>
      %7 = vector.shape_cast %6 : vector<64x64xf32> to vector<4x16x64xf32>
      %8 = arith.truncf %7 : vector<4x16x64xf32> to vector<4x16x64xbf16>
      %c0_4 = arith.constant 0 : index
      %c0_5 = arith.constant 0 : index
      %c0_6 = arith.constant 0 : index
      %9 = vector.load %arg3[%c0_4, %c0_5, %c0_6] : memref<4x64x64xbf16, #tpu.memory_space<vmem>>, vector<4x64x64xbf16>
      %cst = arith.constant dense<0.000000e+00> : vector<4x16x64xf32>
      %10 = tpu.matmul %8, %9, %cst {dimension_numbers = #tpu.dot_dimension_numbers<[2], [2], [1], [1], [0, 0, 0, 1, 1, 1], [0], [0]>} : vector<4x16x64xbf16>, vector<4x64x64xbf16>, vector<4x16x64xf32> -> vector<4x16x64xf32>
      %11 = arith.addf %7, %10 : vector<4x16x64xf32>
      %c0_7 = arith.constant 0 : index
      %c0_8 = arith.constant 0 : index
      %c0_9 = arith.constant 0 : index
      %12 = vector.load %arg4[%c0_7, %c0_8, %c0_9] : memref<4x1x64xf32, #tpu.memory_space<vmem>>, vector<4x1x64xf32>
      %13 = vector.broadcast %12 : vector<4x1x64xf32> to vector<4x16x64xf32>
      %14 = arith.addf %11, %13 : vector<4x16x64xf32>
      %15 = vector.shape_cast %14 : vector<4x16x64xf32> to vector<64x64xf32>
      %c0_10 = arith.constant 0 : index
      %c0_11 = arith.constant 0 : index
      %16 = vector.load %arg5[%c0_10, %c0_11] : memref<32x64xbf16, #tpu.memory_space<vmem>>, vector<32x64xbf16>
      %17 = arith.truncf %3 : vector<64x64xf32> to vector<64x64xbf16>
      %cst_12 = arith.constant dense<0.000000e+00> : vector<32x64xf32>
      %18 = tpu.matmul %16, %17, %cst_12 {dimension_numbers = #tpu.dot_dimension_numbers<[1], [0], [0], [1], [0, 0, 1, 1], [], []>} : vector<32x64xbf16>, vector<64x64xbf16>, vector<32x64xf32> -> vector<32x64xf32>
      %c0_13 = arith.constant 0 : index
      %c0_14 = arith.constant 0 : index
      %19 = vector.load %arg6[%c0_13, %c0_14] : memref<32x1xf32, #tpu.memory_space<vmem>>, vector<32x1xf32>
      %20 = vector.broadcast %19 : vector<32x1xf32> to vector<32x64xf32>
      %21 = arith.addf %18, %20 : vector<32x64xf32>
      %c0_15 = arith.constant 0 : index
      %c0_16 = arith.constant 0 : index
      %22 = vector.load %arg7[%c0_15, %c0_16] : memref<64x64xbf16, #tpu.memory_space<vmem>>, vector<64x64xbf16>
      %23 = arith.truncf %15 : vector<64x64xf32> to vector<64x64xbf16>
      %cst_17 = arith.constant dense<0.000000e+00> : vector<64x64xf32>
      %24 = tpu.matmul %22, %23, %cst_17 {dimension_numbers = #tpu.dot_dimension_numbers<[1], [0], [0], [1], [0, 0, 1, 1], [], []>} : vector<64x64xbf16>, vector<64x64xbf16>, vector<64x64xf32> -> vector<64x64xf32>
      %c0_18 = arith.constant 0 : index
      %c0_19 = arith.constant 0 : index
      %25 = vector.load %arg8[%c0_18, %c0_19] : memref<64x1xf32, #tpu.memory_space<vmem>>, vector<64x1xf32>
      %26 = vector.broadcast %25 : vector<64x1xf32> to vector<64x64xf32>
      %27 = arith.addf %24, %26 : vector<64x64xf32>
      %28 = arith.truncf %21 : vector<32x64xf32> to vector<32x64xbf16>
      %29 = vector.extract_strided_slice %27 {offsets = [0, 0], sizes = [32, 64], strides = [1, 1]} : vector<64x64xf32> to vector<32x64xf32>
      %30 = arith.truncf %29 : vector<32x64xf32> to vector<32x64xbf16>
      %31 = vector.extract_strided_slice %27 {offsets = [32, 0], sizes = [32, 64], strides = [1, 1]} : vector<64x64xf32> to vector<32x64xf32>
      %32 = arith.truncf %31 : vector<32x64xf32> to vector<32x64xbf16>
      %33 = vector.extract_strided_slice %28 {offsets = [0, 0], sizes = [8, 64], strides = [1, 1]} : vector<32x64xbf16> to vector<8x64xbf16>
      %34 = vector.extract_strided_slice %30 {offsets = [0, 0], sizes = [8, 64], strides = [1, 1]} : vector<32x64xbf16> to vector<8x64xbf16>
      %cst_20 = arith.constant dense<0.000000e+00> : vector<64x64xf32>
      %35 = tpu.matmul %33, %34, %cst_20 {dimension_numbers = #tpu.dot_dimension_numbers<[0], [0], [1], [1], [0, 1, 1, 1], [], []>} : vector<8x64xbf16>, vector<8x64xbf16>, vector<64x64xf32> -> vector<64x64xf32>
      %cst_21 = arith.constant 0.353553385 : f32
      %36 = vector.broadcast %cst_21 : f32 to vector<64x64xf32>
      %37 = arith.mulf %35, %36 : vector<64x64xf32>
      %cst_22 = arith.constant dense<0xFF800000> : vector<64xf32>
      %38 = vector.multi_reduction <maximumf>, %37, %cst_22 [1] : vector<64x64xf32> to vector<64xf32>
      %39 = vector.shape_cast %38 : vector<64xf32> to vector<64x1xf32>
      %40 = vector.broadcast %39 : vector<64x1xf32> to vector<64x64xf32>
      %41 = arith.subf %37, %40 : vector<64x64xf32>
      %42 = math.exp %41 : vector<64x64xf32>
      %cst_23 = arith.constant dense<0.000000e+00> : vector<64xf32>
      %43 = vector.multi_reduction <add>, %42, %cst_23 [1] : vector<64x64xf32> to vector<64xf32>
      %44 = vector.shape_cast %43 : vector<64xf32> to vector<64x1xf32>
      %45 = tpu.reciprocal %44 {approx = true} : vector<64x1xf32> -> vector<64x1xf32>
      %46 = vector.broadcast %45 : vector<64x1xf32> to vector<64x64xf32>
      %47 = arith.mulf %42, %46 : vector<64x64xf32>
      %48 = arith.truncf %47 : vector<64x64xf32> to vector<64x64xbf16>
      %49 = vector.extract_strided_slice %32 {offsets = [0, 0], sizes = [8, 64], strides = [1, 1]} : vector<32x64xbf16> to vector<8x64xbf16>
      %cst_24 = arith.constant dense<0.000000e+00> : vector<8x64xf32>
      %50 = tpu.matmul %49, %48, %cst_24 {dimension_numbers = #tpu.dot_dimension_numbers<[1], [1], [0], [0], [0, 0, 1, 0], [], []>} : vector<8x64xbf16>, vector<64x64xbf16>, vector<8x64xf32> -> vector<8x64xf32>
      %51 = vector.extract_strided_slice %28 {offsets = [8, 0], sizes = [8, 64], strides = [1, 1]} : vector<32x64xbf16> to vector<8x64xbf16>
      %52 = vector.extract_strided_slice %30 {offsets = [8, 0], sizes = [8, 64], strides = [1, 1]} : vector<32x64xbf16> to vector<8x64xbf16>
      %cst_25 = arith.constant dense<0.000000e+00> : vector<64x64xf32>
      %53 = tpu.matmul %51, %52, %cst_25 {dimension_numbers = #tpu.dot_dimension_numbers<[0], [0], [1], [1], [0, 1, 1, 1], [], []>} : vector<8x64xbf16>, vector<8x64xbf16>, vector<64x64xf32> -> vector<64x64xf32>
      %cst_26 = arith.constant 0.353553385 : f32
      %54 = vector.broadcast %cst_26 : f32 to vector<64x64xf32>
      %55 = arith.mulf %53, %54 : vector<64x64xf32>
      %cst_27 = arith.constant dense<0xFF800000> : vector<64xf32>
      %56 = vector.multi_reduction <maximumf>, %55, %cst_27 [1] : vector<64x64xf32> to vector<64xf32>
      %57 = vector.shape_cast %56 : vector<64xf32> to vector<64x1xf32>
      %58 = vector.broadcast %57 : vector<64x1xf32> to vector<64x64xf32>
      %59 = arith.subf %55, %58 : vector<64x64xf32>
      %60 = math.exp %59 : vector<64x64xf32>
      %cst_28 = arith.constant dense<0.000000e+00> : vector<64xf32>
      %61 = vector.multi_reduction <add>, %60, %cst_28 [1] : vector<64x64xf32> to vector<64xf32>
      %62 = vector.shape_cast %61 : vector<64xf32> to vector<64x1xf32>
      %63 = tpu.reciprocal %62 {approx = true} : vector<64x1xf32> -> vector<64x1xf32>
      %64 = vector.broadcast %63 : vector<64x1xf32> to vector<64x64xf32>
      %65 = arith.mulf %60, %64 : vector<64x64xf32>
      %66 = arith.truncf %65 : vector<64x64xf32> to vector<64x64xbf16>
      %67 = vector.extract_strided_slice %32 {offsets = [8, 0], sizes = [8, 64], strides = [1, 1]} : vector<32x64xbf16> to vector<8x64xbf16>
      %cst_29 = arith.constant dense<0.000000e+00> : vector<8x64xf32>
      %68 = tpu.matmul %67, %66, %cst_29 {dimension_numbers = #tpu.dot_dimension_numbers<[1], [1], [0], [0], [0, 0, 1, 0], [], []>} : vector<8x64xbf16>, vector<64x64xbf16>, vector<8x64xf32> -> vector<8x64xf32>
      %69 = vector.extract_strided_slice %28 {offsets = [16, 0], sizes = [8, 64], strides = [1, 1]} : vector<32x64xbf16> to vector<8x64xbf16>
      %70 = vector.extract_strided_slice %30 {offsets = [16, 0], sizes = [8, 64], strides = [1, 1]} : vector<32x64xbf16> to vector<8x64xbf16>
      %cst_30 = arith.constant dense<0.000000e+00> : vector<64x64xf32>
      %71 = tpu.matmul %69, %70, %cst_30 {dimension_numbers = #tpu.dot_dimension_numbers<[0], [0], [1], [1], [0, 1, 1, 1], [], []>} : vector<8x64xbf16>, vector<8x64xbf16>, vector<64x64xf32> -> vector<64x64xf32>
      %cst_31 = arith.constant 0.353553385 : f32
      %72 = vector.broadcast %cst_31 : f32 to vector<64x64xf32>
      %73 = arith.mulf %71, %72 : vector<64x64xf32>
      %cst_32 = arith.constant dense<0xFF800000> : vector<64xf32>
      %74 = vector.multi_reduction <maximumf>, %73, %cst_32 [1] : vector<64x64xf32> to vector<64xf32>
      %75 = vector.shape_cast %74 : vector<64xf32> to vector<64x1xf32>
      %76 = vector.broadcast %75 : vector<64x1xf32> to vector<64x64xf32>
      %77 = arith.subf %73, %76 : vector<64x64xf32>
      %78 = math.exp %77 : vector<64x64xf32>
      %cst_33 = arith.constant dense<0.000000e+00> : vector<64xf32>
      %79 = vector.multi_reduction <add>, %78, %cst_33 [1] : vector<64x64xf32> to vector<64xf32>
      %80 = vector.shape_cast %79 : vector<64xf32> to vector<64x1xf32>
      %81 = tpu.reciprocal %80 {approx = true} : vector<64x1xf32> -> vector<64x1xf32>
      %82 = vector.broadcast %81 : vector<64x1xf32> to vector<64x64xf32>
      %83 = arith.mulf %78, %82 : vector<64x64xf32>
      %84 = arith.truncf %83 : vector<64x64xf32> to vector<64x64xbf16>
      %85 = vector.extract_strided_slice %32 {offsets = [16, 0], sizes = [8, 64], strides = [1, 1]} : vector<32x64xbf16> to vector<8x64xbf16>
      %cst_34 = arith.constant dense<0.000000e+00> : vector<8x64xf32>
      %86 = tpu.matmul %85, %84, %cst_34 {dimension_numbers = #tpu.dot_dimension_numbers<[1], [1], [0], [0], [0, 0, 1, 0], [], []>} : vector<8x64xbf16>, vector<64x64xbf16>, vector<8x64xf32> -> vector<8x64xf32>
      %87 = vector.extract_strided_slice %28 {offsets = [24, 0], sizes = [8, 64], strides = [1, 1]} : vector<32x64xbf16> to vector<8x64xbf16>
      %88 = vector.extract_strided_slice %30 {offsets = [24, 0], sizes = [8, 64], strides = [1, 1]} : vector<32x64xbf16> to vector<8x64xbf16>
      %cst_35 = arith.constant dense<0.000000e+00> : vector<64x64xf32>
      %89 = tpu.matmul %87, %88, %cst_35 {dimension_numbers = #tpu.dot_dimension_numbers<[0], [0], [1], [1], [0, 1, 1, 1], [], []>} : vector<8x64xbf16>, vector<8x64xbf16>, vector<64x64xf32> -> vector<64x64xf32>
      %cst_36 = arith.constant 0.353553385 : f32
      %90 = vector.broadcast %cst_36 : f32 to vector<64x64xf32>
      %91 = arith.mulf %89, %90 : vector<64x64xf32>
      %cst_37 = arith.constant dense<0xFF800000> : vector<64xf32>
      %92 = vector.multi_reduction <maximumf>, %91, %cst_37 [1] : vector<64x64xf32> to vector<64xf32>
      %93 = vector.shape_cast %92 : vector<64xf32> to vector<64x1xf32>
      %94 = vector.broadcast %93 : vector<64x1xf32> to vector<64x64xf32>
      %95 = arith.subf %91, %94 : vector<64x64xf32>
      %96 = math.exp %95 : vector<64x64xf32>
      %cst_38 = arith.constant dense<0.000000e+00> : vector<64xf32>
      %97 = vector.multi_reduction <add>, %96, %cst_38 [1] : vector<64x64xf32> to vector<64xf32>
      %98 = vector.shape_cast %97 : vector<64xf32> to vector<64x1xf32>
      %99 = tpu.reciprocal %98 {approx = true} : vector<64x1xf32> -> vector<64x1xf32>
      %100 = vector.broadcast %99 : vector<64x1xf32> to vector<64x64xf32>
      %101 = arith.mulf %96, %100 : vector<64x64xf32>
      %102 = arith.truncf %101 : vector<64x64xf32> to vector<64x64xbf16>
      %103 = vector.extract_strided_slice %32 {offsets = [24, 0], sizes = [8, 64], strides = [1, 1]} : vector<32x64xbf16> to vector<8x64xbf16>
      %cst_39 = arith.constant dense<0.000000e+00> : vector<8x64xf32>
      %104 = tpu.matmul %103, %102, %cst_39 {dimension_numbers = #tpu.dot_dimension_numbers<[1], [1], [0], [0], [0, 0, 1, 0], [], []>} : vector<8x64xbf16>, vector<64x64xbf16>, vector<8x64xf32> -> vector<8x64xf32>
      %105 = tpu.concatenate %50, %68, %86, %104 in 0 : vector<8x64xf32>, vector<8x64xf32>, vector<8x64xf32>, vector<8x64xf32> -> vector<32x64xf32>
      %c0_40 = arith.constant 0 : index
      %c0_41 = arith.constant 0 : index
      %106 = vector.load %arg9[%c0_40, %c0_41] : memref<64x32xbf16, #tpu.memory_space<vmem>>, vector<64x32xbf16>
      %107 = arith.truncf %105 : vector<32x64xf32> to vector<32x64xbf16>
      %cst_42 = arith.constant dense<0.000000e+00> : vector<64x64xf32>
      %108 = tpu.matmul %106, %107, %cst_42 {dimension_numbers = #tpu.dot_dimension_numbers<[1], [0], [0], [1], [0, 0, 1, 1], [], []>} : vector<64x32xbf16>, vector<32x64xbf16>, vector<64x64xf32> -> vector<64x64xf32>
      %c0_43 = arith.constant 0 : index
      %c0_44 = arith.constant 0 : index
      %109 = vector.load %arg10[%c0_43, %c0_44] : memref<64x1xf32, #tpu.memory_space<vmem>>, vector<64x1xf32>
      %110 = vector.broadcast %109 : vector<64x1xf32> to vector<64x64xf32>
      %111 = arith.addf %108, %110 : vector<64x64xf32>
      %112 = arith.addf %3, %111 : vector<64x64xf32>
      %113 = arith.index_cast %arg12 : i32 to index
      %c0_45 = arith.constant 0 : index
      %c0_46 = arith.constant 0 : index
      %114 = vector.load %arg11[%113, %c0_45, %c0_46] : memref<4x64x64xf32, #tpu.memory_space<vmem>>, vector<1x64x64xf32>
      %115 = vector.shape_cast %114 : vector<1x64x64xf32> to vector<64x64xf32>
      %116 = vector.shape_cast %112 : vector<64x64xf32> to vector<1x64x64xf32>
      tpu.vector_store %arg11[%113, %c0_45, %c0_46], %116 {strides = array<i32>} : memref<4x64x64xf32, #tpu.memory_space<vmem>>, vector<1x64x64xf32>,
    }
    %c4_i32_0 = arith.constant 4 : i32
    return
  }
  func.func @transform_0(%arg0: i32) -> (i32, i32, i32) {
    %c0_i32 = arith.constant 0 : i32
    %c0_i32_0 = arith.constant 0 : i32
    %c0_i32_1 = arith.constant 0 : i32
    return %arg0, %c0_i32, %c0_i32_0 : i32, i32, i32
  }
  func.func @transform_1(%arg0: i32) -> (i32, i32, i32) {
    %c0_i32 = arith.constant 0 : i32
    %c0_i32_0 = arith.constant 0 : i32
    %c0_i32_1 = arith.constant 0 : i32
    return %arg0, %c0_i32, %c0_i32_0 : i32, i32, i32
  }
  func.func @transform_2(%arg0: i32) -> (i32, i32, i32) {
    %c0_i32 = arith.constant 0 : i32
    %c0_i32_0 = arith.constant 0 : i32
    %c0_i32_1 = arith.constant 0 : i32
    %c0_i32_2 = arith.constant 0 : i32
    return %c0_i32, %c0_i32_0, %c0_i32_1 : i32, i32, i32
  }
  func.func @transform_3(%arg0: i32) -> (i32, i32, i32) {
    %c0_i32 = arith.constant 0 : i32
    %c0_i32_0 = arith.constant 0 : i32
    %c0_i32_1 = arith.constant 0 : i32
    %c0_i32_2 = arith.constant 0 : i32
    return %c0_i32, %c0_i32_0, %c0_i32_1 : i32, i32, i32
  }
  func.func @transform_4(%arg0: i32) -> (i32, i32) {
    %c0_i32 = arith.constant 0 : i32
    %c0_i32_0 = arith.constant 0 : i32
    %c0_i32_1 = arith.constant 0 : i32
    return %c0_i32, %c0_i32_0 : i32, i32
  }
  func.func @transform_5(%arg0: i32) -> (i32, i32) {
    %c0_i32 = arith.constant 0 : i32
    %c0_i32_0 = arith.constant 0 : i32
    %c0_i32_1 = arith.constant 0 : i32
    return %c0_i32, %c0_i32_0 : i32, i32
  }
  func.func @transform_6(%arg0: i32) -> (i32, i32) {
    %c0_i32 = arith.constant 0 : i32
    %c0_i32_0 = arith.constant 0 : i32
    %c0_i32_1 = arith.constant 0 : i32
    return %c0_i32, %c0_i32_0 : i32, i32
  }
  func.func @transform_7(%arg0: i32) -> (i32, i32) {
    %c0_i32 = arith.constant 0 : i32
    %c0_i32_0 = arith.constant 0 : i32
    %c0_i32_1 = arith.constant 0 : i32
    return %c0_i32, %c0_i32_0 : i32, i32
  }
  func.func @transform_8(%arg0: i32) -> (i32, i32) {
    %c0_i32 = arith.constant 0 : i32
    %c0_i32_0 = arith.constant 0 : i32
    %c0_i32_1 = arith.constant 0 : i32
    return %c0_i32, %c0_i32_0 : i32, i32
  }
  func.func @transform_9(%arg0: i32) -> (i32, i32) {
    %c0_i32 = arith.constant 0 : i32
    %c0_i32_0 = arith.constant 0 : i32
    %c0_i32_1 = arith.constant 0 : i32
    return %c0_i32, %c0_i32_0 : i32, i32
  }
  func.func @transform_10(%arg0: i32) -> (i32, i32, i32) {
    %c0_i32 = arith.constant 0 : i32
    %c0_i32_0 = arith.constant 0 : i32
    %c0_i32_1 = arith.constant 0 : i32
    return %arg0, %c0_i32, %c0_i32_0 : i32, i32, i32
  }
}

</mosaic_0001>

<llo_original>
// kernel: lawin_attn_forward.1
$region0: #{lawin_attn_forward.1}
  #allocation0 [shape = 'u32[]', space=smem, size = 0x4, offset = 0x4, fixed_abs, tag = 'smem constant byte address 0x4 - core index']
  #allocation1 [shape = 'u32[144,128]{1,0:T(1,128)}', space=vmem, size = 0x12000, scoped, tag = 'internal scratch']
  %s0 = inlined_call_operand.vmem [shape: f32[8,64,64], index: 0, kind: input, shape index: {}]
  %s1 = inlined_call_operand.vmem [shape: f32[8,64,64], index: 1, kind: input, shape index: {}]
  %s2 = inlined_call_operand.vmem [shape: bf16[4,64,64], index: 2, kind: input, shape index: {}]
  %s3 = inlined_call_operand.vmem [shape: f32[4,1,64], index: 3, kind: input, shape index: {}]
  %s4 = inlined_call_operand.vmem [shape: bf16[32,64], index: 4, kind: input, shape index: {}]
  %s5 = inlined_call_operand.vmem [shape: f32[32,1], index: 5, kind: input, shape index: {}]
  %s6 = inlined_call_operand.vmem [shape: bf16[64,64], index: 6, kind: input, shape index: {}]
  %s7 = inlined_call_operand.vmem [shape: f32[64,1], index: 7, kind: input, shape index: {}]
  %s8 = inlined_call_operand.vmem [shape: bf16[64,32], index: 8, kind: input, shape index: {}]
  %s9 = inlined_call_operand.vmem [shape: f32[64,1], index: 9, kind: input, shape index: {}]
  %s10 = inlined_call_operand.vmem [shape: f32[8,64,64], index: 10, kind: output, shape index: {}]
  %s11 = sld [smem:[#allocation0]]
  $region80: #{lawin_attn_forward.1} parent=0
    _
  %s13 = ssub.s32 1, %s11
  %s14 = scalar_select 0, %s13, %s11
  loop: start=0, step=1, limit=4
  $region2: #{lawin_attn_forward.1} parent=0 // loop_pre_header
    _
  $region3: #{lawin_attn_forward.1} parent=0 // loop_header
    %s16 = sphi 0, %s20
    %p17 = scmp.ge.s32.totalorder %s16, 4
    %s26 = sphi 0, %s28
    %s29 = sphi 0, %s26
    %s30 = sphi 0, %s29
    %s46 = sphi 0, %s30
    %s52 = sphi 0, %s54
    %s55 = sphi 0, %s52
    %s56 = sphi 0, %s55
    %s72 = sphi 0, %s56
    %s76 = sphi 0, %s76
    %s78 = sphi 0, %s76
    %s79 = sphi 0, %s78
    %s93 = sphi 0, %s79
    %s97 = sphi 0, %s97
    %s99 = sphi 0, %s97
    %s100 = sphi 0, %s99
    %s114 = sphi 0, %s100
    %s118 = sphi 0, %s118
    %s120 = sphi 0, %s118
    %s121 = sphi 0, %s120
    %s135 = sphi 0, %s121
    %s139 = sphi 0, %s139
    %s141 = sphi 0, %s139
    %s142 = sphi 0, %s141
    %s156 = sphi 0, %s142
    %s160 = sphi 0, %s160
    %s162 = sphi 0, %s160
    %s163 = sphi 0, %s162
    %s177 = sphi 0, %s163
    %s181 = sphi 0, %s181
    %s183 = sphi 0, %s181
    %s184 = sphi 0, %s183
    %s198 = sphi 0, %s184
    %s202 = sphi 0, %s202
    %s204 = sphi 0, %s202
    %s205 = sphi 0, %s204
    %s219 = sphi 0, %s205
    %s223 = sphi 0, %s223
    %s225 = sphi 0, %s223
    %s226 = sphi 0, %s225
    %s240 = sphi 0, %s226
    %s246 = sphi 0, %s248
    %s249 = sphi 0, %s246
    %s250 = sphi 0, %s249
    %s266 = sphi 0, %s250
  $region4: #{lawin_attn_forward.1} parent=0 // loop_header_branch
    %19 = sbr.rel (%p17) target = $region8
  $region5: #{lawin_attn_forward.1} parent=0 // loop_body
    %s21 = ssub.s32 %s16, 1
    %s22 = ssub.s32 %s16, 2
    %s23 = sadd.s32 %s16, 1
    %s24 = ssub.s32 %s16, %s23
    %p25 = scmp.eq.s32.totalorder %s24, 0
    %s27 = sadd.s32 %s26, 1
    %s28 = scalar_select %p25, %s26, %s27
    %p31 = pneg %p25
    %p32 = scmp.eq.s32.totalorder %s16, 1
    %p33 = por %p31, %p32
    %p34 = scmp.ne.s32.totalorder %s26, %s29
    %p35 = scmp.eq.s32.totalorder %s16, 0
    %p36 = por %p34, %p35
    %p37 = scmp.ne.s32.totalorder %s26, %s29
    %p38 = scmp.eq.s32.totalorder %s21, 1
    %p39 = por %p37, %p38
    %p40 = scmp.ne.s32.totalorder %s29, %s30
    %p41 = scmp.eq.s32.totalorder %s21, 0
    %p42 = por %p40, %p41
    %p43 = scmp.ne.s32.totalorder %s29, %s30
    %p44 = scmp.eq.s32.totalorder %s22, 1
    %p45 = por %p43, %p44
    %p47 = scmp.ne.s32.totalorder %s30, %s46
    %p48 = scmp.eq.s32.totalorder %s22, 0
    %p49 = por %p47, %p48
    %s50 = ssub.s32 %s16, %s23
    %p51 = scmp.eq.s32.totalorder %s50, 0
    %s53 = sadd.s32 %s52, 1
    %s54 = scalar_select %p51, %s52, %s53
    %p57 = pneg %p51
    %p58 = scmp.eq.s32.totalorder %s16, 1
    %p59 = por %p57, %p58
    %p60 = scmp.ne.s32.totalorder %s52, %s55
    %p61 = scmp.eq.s32.totalorder %s16, 0
    %p62 = por %p60, %p61
    %p63 = scmp.ne.s32.totalorder %s52, %s55
    %p64 = scmp.eq.s32.totalorder %s21, 1
    %p65 = por %p63, %p64
    %p66 = scmp.ne.s32.totalorder %s55, %s56
    %p67 = scmp.eq.s32.totalorder %s21, 0
    %p68 = por %p66, %p67
    %p69 = scmp.ne.s32.totalorder %s55, %s56
    %p70 = scmp.eq.s32.totalorder %s22, 1
    %p71 = por %p69, %p70
    %p73 = scmp.ne.s32.totalorder %s56, %s72
    %p74 = scmp.eq.s32.totalorder %s22, 0
    %p75 = por %p73, %p74
    %s77 = sadd.s32 %s76, 1
    %p80 = scmp.eq.s32.totalorder %s16, 1
    %p81 = scmp.ne.s32.totalorder %s76, %s78
    %p82 = scmp.eq.s32.totalorder %s16, 0
    %p83 = por %p81, %p82
    %p84 = scmp.ne.s32.totalorder %s76, %s78
    %p85 = scmp.eq.s32.totalorder %s21, 1
    %p86 = por %p84, %p85
    %p87 = scmp.ne.s32.totalorder %s78, %s79
    %p88 = scmp.eq.s32.totalorder %s21, 0
    %p89 = por %p87, %p88
    %p90 = scmp.ne.s32.totalorder %s78, %s79
    %p91 = scmp.eq.s32.totalorder %s22, 1
    %p92 = por %p90, %p91
    %p94 = scmp.ne.s32.totalorder %s79, %s93
    %p95 = scmp.eq.s32.totalorder %s22, 0
    %p96 = por %p94, %p95
    %s98 = sadd.s32 %s97, 1
    %p101 = scmp.eq.s32.totalorder %s16, 1
    %p102 = scmp.ne.s32.totalorder %s97, %s99
    %p103 = scmp.eq.s32.totalorder %s16, 0
    %p104 = por %p102, %p103
    %p105 = scmp.ne.s32.totalorder %s97, %s99
    %p106 = scmp.eq.s32.totalorder %s21, 1
    %p107 = por %p105, %p106
    %p108 = scmp.ne.s32.totalorder %s99, %s100
    %p109 = scmp.eq.s32.totalorder %s21, 0
    %p110 = por %p108, %p109
    %p111 = scmp.ne.s32.totalorder %s99, %s100
    %p112 = scmp.eq.s32.totalorder %s22, 1
    %p113 = por %p111, %p112
    %p115 = scmp.ne.s32.totalorder %s100, %s114
    %p116 = scmp.eq.s32.totalorder %s22, 0
    %p117 = por %p115, %p116
    %s119 = sadd.s32 %s118, 1
    %p122 = scmp.eq.s32.totalorder %s16, 1
    %p123 = scmp.ne.s32.totalorder %s118, %s120
    %p124 = scmp.eq.s32.totalorder %s16, 0
    %p125 = por %p123, %p124
    %p126 = scmp.ne.s32.totalorder %s118, %s120
    %p127 = scmp.eq.s32.totalorder %s21, 1
    %p128 = por %p126, %p127
    %p129 = scmp.ne.s32.totalorder %s120, %s121
    %p130 = scmp.eq.s32.totalorder %s21, 0
    %p131 = por %p129, %p130
    %p132 = scmp.ne.s32.totalorder %s120, %s121
    %p133 = scmp.eq.s32.totalorder %s22, 1
    %p134 = por %p132, %p133
    %p136 = scmp.ne.s32.totalorder %s121, %s135
    %p137 = scmp.eq.s32.totalorder %s22, 0
    %p138 = por %p136, %p137
    %s140 = sadd.s32 %s139, 1
    %p143 = scmp.eq.s32.totalorder %s16, 1
    %p144 = scmp.ne.s32.totalorder %s139, %s141
    %p145 = scmp.eq.s32.totalorder %s16, 0
    %p146 = por %p144, %p145
    %p147 = scmp.ne.s32.totalorder %s139, %s141
    %p148 = scmp.eq.s32.totalorder %s21, 1
    %p149 = por %p147, %p148
    %p150 = scmp.ne.s32.totalorder %s141, %s142
    %p151 = scmp.eq.s32.totalorder %s21, 0
    %p152 = por %p150, %p151
    %p153 = scmp.ne.s32.totalorder %s141, %s142
    %p154 = scmp.eq.s32.totalorder %s22, 1
    %p155 = por %p153, %p154
    %p157 = scmp.ne.s32.totalorder %s142, %s156
    %p158 = scmp.eq.s32.totalorder %s22, 0
    %p159 = por %p157, %p158
    %s161 = sadd.s32 %s160, 1
    %p164 = scmp.eq.s32.totalorder %s16, 1
    %p165 = scmp.ne.s32.totalorder %s160, %s162
    %p166 = scmp.eq.s32.totalorder %s16, 0
    %p167 = por %p165, %p166
    %p168 = scmp.ne.s32.totalorder %s160, %s162
    %p169 = scmp.eq.s32.totalorder %s21, 1
    %p170 = por %p168, %p169
    %p171 = scmp.ne.s32.totalorder %s162, %s163
    %p172 = scmp.eq.s32.totalorder %s21, 0
    %p173 = por %p171, %p172
    %p174 = scmp.ne.s32.totalorder %s162, %s163
    %p175 = scmp.eq.s32.totalorder %s22, 1
    %p176 = por %p174, %p175
    %p178 = scmp.ne.s32.totalorder %s163, %s177
    %p179 = scmp.eq.s32.totalorder %s22, 0
    %p180 = por %p178, %p179
    %s182 = sadd.s32 %s181, 1
    %p185 = scmp.eq.s32.totalorder %s16, 1
    %p186 = scmp.ne.s32.totalorder %s181, %s183
    %p187 = scmp.eq.s32.totalorder %s16, 0
    %p188 = por %p186, %p187
    %p189 = scmp.ne.s32.totalorder %s181, %s183
    %p190 = scmp.eq.s32.totalorder %s21, 1
    %p191 = por %p189, %p190
    %p192 = scmp.ne.s32.totalorder %s183, %s184
    %p193 = scmp.eq.s32.totalorder %s21, 0
    %p194 = por %p192, %p193
    %p195 = scmp.ne.s32.totalorder %s183, %s184
    %p196 = scmp.eq.s32.totalorder %s22, 1
    %p197 = por %p195, %p196
    %p199 = scmp.ne.s32.totalorder %s184, %s198
    %p200 = scmp.eq.s32.totalorder %s22, 0
    %p201 = por %p199, %p200
    %s203 = sadd.s32 %s202, 1
    %p206 = scmp.eq.s32.totalorder %s16, 1
    %p207 = scmp.ne.s32.totalorder %s202, %s204
    %p208 = scmp.eq.s32.totalorder %s16, 0
    %p209 = por %p207, %p208
    %p210 = scmp.ne.s32.totalorder %s202, %s204
    %p211 = scmp.eq.s32.totalorder %s21, 1
    %p212 = por %p210, %p211
    %p213 = scmp.ne.s32.totalorder %s204, %s205
    %p214 = scmp.eq.s32.totalorder %s21, 0
    %p215 = por %p213, %p214
    %p216 = scmp.ne.s32.totalorder %s204, %s205
    %p217 = scmp.eq.s32.totalorder %s22, 1
    %p218 = por %p216, %p217
    %p220 = scmp.ne.s32.totalorder %s205, %s219
    %p221 = scmp.eq.s32.totalorder %s22, 0
    %p222 = por %p220, %p221
    %s224 = sadd.s32 %s223, 1
    %p227 = scmp.eq.s32.totalorder %s16, 1
    %p228 = scmp.ne.s32.totalorder %s223, %s225
    %p229 = scmp.eq.s32.totalorder %s16, 0
    %p230 = por %p228, %p229
    %p231 = scmp.ne.s32.totalorder %s223, %s225
    %p232 = scmp.eq.s32.totalorder %s21, 1
    %p233 = por %p231, %p232
    %p234 = scmp.ne.s32.totalorder %s225, %s226
    %p235 = scmp.eq.s32.totalorder %s21, 0
    %p236 = por %p234, %p235
    %p237 = scmp.ne.s32.totalorder %s225, %s226
    %p238 = scmp.eq.s32.totalorder %s22, 1
    %p239 = por %p237, %p238
    %p241 = scmp.ne.s32.totalorder %s226, %s240
    %p242 = scmp.eq.s32.totalorder %s22, 0
    %p243 = por %p241, %p242
    %s244 = ssub.s32 %s16, %s23
    %p245 = scmp.eq.s32.totalorder %s244, 0
    %s247 = sadd.s32 %s246, 1
    %s248 = scalar_select %p245, %s246, %s247
    %p251 = pneg %p245
    %p252 = scmp.eq.s32.totalorder %s16, 1
    %p253 = por %p251, %p252
    %p254 = scmp.ne.s32.totalorder %s246, %s249
    %p255 = scmp.eq.s32.totalorder %s16, 0
    %p256 = por %p254, %p255
    %p257 = scmp.ne.s32.totalorder %s246, %s249
    %p258 = scmp.eq.s32.totalorder %s21, 1
    %p259 = por %p257, %p258
    %p260 = scmp.ne.s32.totalorder %s249, %s250
    %p261 = scmp.eq.s32.totalorder %s21, 0
    %p262 = por %p260, %p261
    %p263 = scmp.ne.s32.totalorder %s249, %s250
    %p264 = scmp.eq.s32.totalorder %s22, 1
    %p265 = por %p263, %p264
    %p267 = scmp.ne.s32.totalorder %s250, %s266
    %p268 = scmp.eq.s32.totalorder %s22, 0
    %p269 = por %p267, %p268
    %p270 = scmp.le.s32.totalorder 1, %s16
    %p271 = scmp.lt.s32.totalorder %s16, 3
    %p272 = pnand %p270, %p271
    %p273 = pneg %p272
    // Predicated region
    $region9: #{lawin_attn_forward.1} parent=5 // pred_check
      _
    $region10: #{lawin_attn_forward.1} parent=5 // pred_check_branch
      %275 = sbr.rel (%p272) target = $region12
    $region11: #{lawin_attn_forward.1} parent=5 // pred_region
      %s276 = ssub.s32 %s16, 1
      // Predicated region
      $region13: #{lawin_attn_forward.1} parent=11 // pred_check
        %p277 = pneg %p89
      $region14: #{lawin_attn_forward.1} parent=11 // pred_check_branch
        %279 = sbr.rel (%p277) target = $region16
      $region15: #{lawin_attn_forward.1} parent=11 // pred_region
        _
      $region16: #{lawin_attn_forward.1} parent=11 // pred_fallthru
        _
      // Predicated region
      $region17: #{lawin_attn_forward.1} parent=11 // pred_check
        %p280 = pneg %p110
      $region18: #{lawin_attn_forward.1} parent=11 // pred_check_branch
        %282 = sbr.rel (%p280) target = $region20
      $region19: #{lawin_attn_forward.1} parent=11 // pred_region
        _
      $region20: #{lawin_attn_forward.1} parent=11 // pred_fallthru
        _
      // Predicated region
      $region21: #{lawin_attn_forward.1} parent=11 // pred_check
        %p283 = pneg %p131
      $region22: #{lawin_attn_forward.1} parent=11 // pred_check_branch
        %285 = sbr.rel (%p283) target = $region24
      $region23: #{lawin_attn_forward.1} parent=11 // pred_region
        _
      $region24: #{lawin_attn_forward.1} parent=11 // pred_fallthru
        _
      // Predicated region
      $region25: #{lawin_attn_forward.1} parent=11 // pred_check
        %p286 = pneg %p152
      $region26: #{lawin_attn_forward.1} parent=11 // pred_check_branch
        %288 = sbr.rel (%p286) target = $region28
      $region27: #{lawin_attn_forward.1} parent=11 // pred_region
        _
      $region28: #{lawin_attn_forward.1} parent=11 // pred_fallthru
        _
      // Predicated region
      $region29: #{lawin_attn_forward.1} parent=11 // pred_check
        %p289 = pneg %p173
      $region30: #{lawin_attn_forward.1} parent=11 // pred_check_branch
        %291 = sbr.rel (%p289) target = $region32
      $region31: #{lawin_attn_forward.1} parent=11 // pred_region
        _
      $region32: #{lawin_attn_forward.1} parent=11 // pred_fallthru
        _
      // Predicated region
      $region33: #{lawin_attn_forward.1} parent=11 // pred_check
        %p292 = pneg %p194
      $region34: #{lawin_attn_forward.1} parent=11 // pred_check_branch
        %294 = sbr.rel (%p292) target = $region36
      $region35: #{lawin_attn_forward.1} parent=11 // pred_region
        _
      $region36: #{lawin_attn_forward.1} parent=11 // pred_fallthru
        _
      // Predicated region
      $region37: #{lawin_attn_forward.1} parent=11 // pred_check
        %p295 = pneg %p215
      $region38: #{lawin_attn_forward.1} parent=11 // pred_check_branch
        %297 = sbr.rel (%p295) target = $region40
      $region39: #{lawin_attn_forward.1} parent=11 // pred_region
        _
      $region40: #{lawin_attn_forward.1} parent=11 // pred_fallthru
        _
      // Predicated region
      $region41: #{lawin_attn_forward.1} parent=11 // pred_check
        %p298 = pneg %p236
      $region42: #{lawin_attn_forward.1} parent=11 // pred_check_branch
        %300 = sbr.rel (%p298) target = $region44
      $region43: #{lawin_attn_forward.1} parent=11 // pred_region
        _
      $region44: #{lawin_attn_forward.1} parent=11 // pred_fallthru
        _
    $region12: #{lawin_attn_forward.1} parent=5 // pred_fallthru
      _
    %p301 = scmp.lt.s32.totalorder %s16, 2
    // Predicated region
    $region45: #{lawin_attn_forward.1} parent=5 // pred_check
      %p302 = pneg %p301
    $region46: #{lawin_attn_forward.1} parent=5 // pred_check_branch
      %304 = sbr.rel (%p302) target = $region48
    $region47: #{lawin_attn_forward.1} parent=5 // pred_region
      // Predicated region
      $region49: #{lawin_attn_forward.1} parent=47 // pred_check
        %p305 = pneg %p36
      $region50: #{lawin_attn_forward.1} parent=47 // pred_check_branch
        %307 = sbr.rel (%p305) target = $region52
      $region51: #{lawin_attn_forward.1} parent=47 // pred_region
        %s308 = smul.u32 4, %s16
        %p309 = scmp.lt.s32.totalorder %s308, 7
        %s310 = scalar_select %p309, %s308, 7
        %s311 = smul.addr %s310, 8
        %s312 = smul.addr %s311, 8
        %s313 = scalar_lea.vmem %s0, %s312
        %s314 = smul.u32 4, %s16
      $region52: #{lawin_attn_forward.1} parent=47 // pred_fallthru
        _
      // Predicated region
      $region53: #{lawin_attn_forward.1} parent=47 // pred_check
        %p315 = pneg %p62
      $region54: #{lawin_attn_forward.1} parent=47 // pred_check_branch
        %317 = sbr.rel (%p315) target = $region56
      $region55: #{lawin_attn_forward.1} parent=47 // pred_region
        %s318 = smul.u32 4, %s16
        %p319 = scmp.lt.s32.totalorder %s318, 7
        %s320 = scalar_select %p319, %s318, 7
        %s321 = smul.addr %s320, 8
        %s322 = smul.addr %s321, 8
        %s323 = scalar_lea.vmem %s1, %s322
        %s324 = smul.u32 4, %s16
      $region56: #{lawin_attn_forward.1} parent=47 // pred_fallthru
        _
    $region48: #{lawin_attn_forward.1} parent=5 // pred_fallthru
      _
    %p325 = scmp.le.s32.totalorder 1, %s16
    %p326 = scmp.lt.s32.totalorder %s16, 3
    %p327 = pnand %p325, %p326
    %p328 = pneg %p327
    // Predicated region
    $region57: #{lawin_attn_forward.1} parent=5 // pred_check
      _
    $region58: #{lawin_attn_forward.1} parent=5 // pred_check_branch
      %330 = sbr.rel (%p327) target = $region60
    $region59: #{lawin_attn_forward.1} parent=5 // pred_region
      %s331 = ssub.s32 %s16, 1
      %s332 = smul.u32 4, %s21
      %p333 = scmp.lt.s32.totalorder %s332, 7
      %s334 = scalar_select %p333, %s332, 7
      %s335 = smul.addr %s334, 8
      %s336 = smul.addr %s335, 8
      %s337 = scalar_lea.vmem %s0, %s336
      %p338 = pneg %p42
      %p339 = pneg %p39
      %s340 = smul.u32 4, %s21
      %p341 = scmp.lt.s32.totalorder %s340, 7
      %s342 = scalar_select %p341, %s340, 7
      %s343 = smul.addr %s342, 8
      %s344 = smul.addr %s343, 8
      %s345 = scalar_lea.vmem %s1, %s344
      %p346 = pneg %p68
      %p347 = pneg %p65
      %p348 = pneg %p89
      %p349 = pneg %p86
      %p350 = pneg %p110
      %p351 = pneg %p107
      %p352 = pneg %p131
      %p353 = pneg %p128
      %p354 = pneg %p152
      %p355 = pneg %p149
      %p356 = pneg %p173
      %p357 = pneg %p170
      %p358 = pneg %p194
      %p359 = pneg %p191
      %p360 = pneg %p215
      %p361 = pneg %p212
      %p362 = pneg %p236
      %p363 = pneg %p233
      %p364 = pneg %p262
      %p365 = pneg %p259
      %s366 = smul.u32 4, %s21
      %p367 = scmp.lt.s32.totalorder %s366, 7
      %s368 = scalar_select %p367, %s366, 7
      %s369 = smul.addr %s368, 8
      %s370 = smul.addr %s369, 8
      %s371 = scalar_lea.vmem %s10, %s370
      %s372 = smul.u32 4, %s21
      %p373 = scmp.lt.s32.totalorder %s372, 7
      %s374 = scalar_select %p373, %s372, 7
      %s375 = smul.addr %s374, 8
      %s376 = smul.addr %s375, 8
      %s377 = scalar_lea.vmem %s0, %s376
      %s378 = smul.u32 4, %s21
      %s379 = smul.u32 4, %s21
      %p380 = scmp.lt.s32.totalorder %s379, 7
      %s381 = scalar_select %p380, %s379, 7
      %s382 = smul.addr %s381, 8
      %s383 = smul.addr %s382, 8
      %s384 = scalar_lea.vmem %s1, %s383
      %s385 = smul.u32 4, %s21
      %s386 = smul.u32 4, %s21
      %p387 = scmp.lt.s32.totalorder %s386, 7
      %s388 = scalar_select %p387, %s386, 7
      %s389 = smul.addr %s388, 8
      %s390 = smul.addr %s389, 8
      %s391 = scalar_lea.vmem %s10, %s390
      %s392 = smul.u32 4, %s21
      loop: start=0, step=1, limit=4
      $region61: #{lawin_attn_forward.1} parent=59 // loop_pre_header
        _
      $region62: #{lawin_attn_forward.1} parent=59 // loop_header
        %s395 = sphi 0, %s399
        %p396 = scmp.ge.s32.totalorder %s395, 4
      $region63: #{lawin_attn_forward.1} parent=59 // loop_header_branch
        %398 = sbr.rel (%p396) target = $region67
      $region64: #{lawin_attn_forward.1} parent=59 // loop_body
        %s400 = smul.u32 %s395, 64
        %s401 = scalar_lea.vmem %s377, %s400
        %v402 = vld [vmem:[%s401] sm:$0xff]
        %v403 = vld [vmem:[%s401 + $0x8] sm:$0xff]
        %v404 = vld [vmem:[%s401 + $0x10] sm:$0xff]
        %v405 = vld [vmem:[%s401 + $0x18] sm:$0xff]
        %v406 = vld [vmem:[%s401 + $0x20] sm:$0xff]
        %v407 = vld [vmem:[%s401 + $0x28] sm:$0xff]
        %v408 = vld [vmem:[%s401 + $0x30] sm:$0xff]
        %v409 = vld [vmem:[%s401 + $0x38] sm:$0xff]
        %s410 = scalar_lea.vmem %s384, %s400
        %v411 = vld [vmem:[%s410] sm:$0xff]
        %v412 = vld [vmem:[%s410 + $0x8] sm:$0xff]
        %v413 = vld [vmem:[%s410 + $0x10] sm:$0xff]
        %v414 = vld [vmem:[%s410 + $0x18] sm:$0xff]
        %v415 = vld [vmem:[%s410 + $0x20] sm:$0xff]
        %v416 = vld [vmem:[%s410 + $0x28] sm:$0xff]
        %v417 = vld [vmem:[%s410 + $0x30] sm:$0xff]
        %v418 = vld [vmem:[%s410 + $0x38] sm:$0xff]
        %v419 = vpack.c.bf16 %v412, %v411
        %v420 = vpack.c.bf16 %v414, %v413
        %v421 = vpack.c.bf16 %v416, %v415
        %v422 = vpack.c.bf16 %v418, %v417
        %v423 = vld [vmem:[%s2] sm:$0xf]
        %v424 = vld [vmem:[%s2 + $0x4] sm:$0xf]
        %v425 = vld [vmem:[%s2 + $0x8] sm:$0xf]
        %v426 = vld [vmem:[%s2 + $0xc] sm:$0xf]
        %v427 = vld [vmem:[%s2 + $0x10] sm:$0xf]
        %v428 = vld [vmem:[%s2 + $0x14] sm:$0xf]
        %v429 = vld [vmem:[%s2 + $0x18] sm:$0xf]
        %v430 = vld [vmem:[%s2 + $0x1c] sm:$0xf]
        %v431 = vld [vmem:[%s2 + $0x20] sm:$0xf]
        %v432 = vld [vmem:[%s2 + $0x24] sm:$0xf]
        %v433 = vld [vmem:[%s2 + $0x28] sm:$0xf]
        %v434 = vld [vmem:[%s2 + $0x2c] sm:$0xf]
        %v435 = vld [vmem:[%s2 + $0x30] sm:$0xf]
        %v436 = vld [vmem:[%s2 + $0x34] sm:$0xf]
        %v437 = vld [vmem:[%s2 + $0x38] sm:$0xf]
        %v438 = vld [vmem:[%s2 + $0x3c] sm:$0xf]
        %v439 = vld [vmem:[%s2 + $0x40] sm:$0xf]
        %v440 = vld [vmem:[%s2 + $0x44] sm:$0xf]
        %v441 = vld [vmem:[%s2 + $0x48] sm:$0xf]
        %v442 = vld [vmem:[%s2 + $0x4c] sm:$0xf]
        %v443 = vld [vmem:[%s2 + $0x50] sm:$0xf]
        %v444 = vld [vmem:[%s2 + $0x54] sm:$0xf]
        %v445 = vld [vmem:[%s2 + $0x58] sm:$0xf]
        %v446 = vld [vmem:[%s2 + $0x5c] sm:$0xf]
        %v447 = vld [vmem:[%s2 + $0x60] sm:$0xf]
        %v448 = vld [vmem:[%s2 + $0x64] sm:$0xf]
        %v449 = vld [vmem:[%s2 + $0x68] sm:$0xf]
        %v450 = vld [vmem:[%s2 + $0x6c] sm:$0xf]
        %v451 = vld [vmem:[%s2 + $0x70] sm:$0xf]
        %v452 = vld [vmem:[%s2 + $0x74] sm:$0xf]
        %v453 = vld [vmem:[%s2 + $0x78] sm:$0xf]
        %v454 = vld [vmem:[%s2 + $0x7c] sm:$0xf]
        %v463 = vunpack.c.l.b16 %v423
        %v464 = vunpack.c.l.b16 %v424
        %v465 = vunpack.c.l.b16 %v425
        %v466 = vunpack.c.l.b16 %v426
        %v467 = vunpack.c.l.b16 %v427
        %v468 = vunpack.c.l.b16 %v428
        %v469 = vunpack.c.l.b16 %v429
        %v470 = vunpack.c.l.b16 %v430
        %v471 = vpack.c.b16 %v464, %v463
        %v472 = vpack.c.b16 %v466, %v465
        %v473 = vpack.c.b16 %v468, %v467
        %v474 = vpack.c.b16 %v470, %v469
        %vm475 = vcmask 523264
        %v477 = vsel %vm475, %v419, 0
        %v480 = vsel %vm475, %v471, 0
        %v483 = vsel %vm475, %v472, 0
        %v486 = vsel %vm475, %v473, 0
        %v489 = vsel %vm475, %v474, 0
        %491 = vmatprep.subr.bf16.mxu0 0
        %492 = vmatpush1.bf16.xpose.msra.mxu0 %v480
        %493 = vmatprep.subr.bf16.mxu0 0
        %494 = vmatpush1.bf16.xpose.msra.mxu0 %v483
        %495 = vmatprep.subr.bf16.mxu0 0
        %496 = vmatpush1.bf16.xpose.msra.mxu0 %v486
        %497 = vmatprep.subr.bf16.mxu0 0
        %498 = vmatpush1.bf16.xpose.msra.mxu0 %v489
        %499 = vmatprep.subr.bf16.mxu0 0
        %500 = vmatpush1.bf16.xpose.msra.mxu0 0
        %501 = vmatprep.subr.bf16.mxu0 0
        %502 = vmatpush1.bf16.xpose.msra.mxu0 0
        %503 = vmatprep.subr.bf16.mxu0 0
        %504 = vmatpush1.bf16.xpose.msra.mxu0 0
        %505 = vmatprep.subr.bf16.mxu0 0
        %506 = vmatpush1.bf16.xpose.msra.mxu0 0
        %507 = vmatprep.subr.bf16.mxu0 0
        %508 = vmatpush1.bf16.xpose.msra.mxu0 0
        %509 = vmatprep.subr.bf16.mxu0 0
        %510 = vmatpush1.bf16.xpose.msra.mxu0 0
        %511 = vmatprep.subr.bf16.mxu0 0
        %512 = vmatpush1.bf16.xpose.msra.mxu0 0
        %513 = vmatprep.subr.bf16.mxu0 0
        %514 = vmatpush1.bf16.xpose.msra.mxu0 0
        %515 = vmatprep.subr.bf16.mxu0 0
        %516 = vmatpush1.bf16.xpose.msra.mxu0 0
        %517 = vmatprep.subr.bf16.mxu0 0
        %518 = vmatpush1.bf16.xpose.msra.mxu0 0
        %519 = vmatprep.subr.bf16.mxu0 0
        %520 = vmatpush1.bf16.xpose.msra.mxu0 0
        %521 = vmatprep.subr.bf16.mxu0 0
        %522 = vmatpush1.bf16.xpose.msra.mxu0 0
        %523 = vmatprep.mubr.bf16.mxu0 0
        %524 = vmatmul.mubr.bf16.gmra.mrb[0].mxu0 %v477
        %v525 = vpop.f32.mrb[0].mxu0
        %v526 = vadd.f32 0.0, %v525
        %v527 = vpop.f32.mrb[0].mxu0
        %v528 = vpop.f32.mrb[0].mxu0
        %v529 = vadd.f32 0.0, %v528
        %v530 = vpop.f32.mrb[0].mxu0
        %531 = vdwg.mxu0
        %v540 = vunpack.c.l.b16 %v431
        %v541 = vunpack.c.l.b16 %v432
        %v542 = vunpack.c.l.b16 %v433
        %v543 = vunpack.c.l.b16 %v434
        %v544 = vunpack.c.l.b16 %v435
        %v545 = vunpack.c.l.b16 %v436
        %v546 = vunpack.c.l.b16 %v437
        %v547 = vunpack.c.l.b16 %v438
        %v548 = vpack.c.b16 %v541, %v540
        %v549 = vpack.c.b16 %v543, %v542
        %v550 = vpack.c.b16 %v545, %v544
        %v551 = vpack.c.b16 %v547, %v546
        %v553 = vsel %vm475, %v420, 0
        %v556 = vsel %vm475, %v548, 0
        %v559 = vsel %vm475, %v549, 0
        %v562 = vsel %vm475, %v550, 0
        %v565 = vsel %vm475, %v551, 0
        %567 = vmatprep.subr.bf16.mxu0 0
        %568 = vmatpush1.bf16.xpose.msra.mxu0 %v556
        %569 = vmatprep.subr.bf16.mxu0 0
        %570 = vmatpush1.bf16.xpose.msra.mxu0 %v559
        %571 = vmatprep.subr.bf16.mxu0 0
        %572 = vmatpush1.bf16.xpose.msra.mxu0 %v562
        %573 = vmatprep.subr.bf16.mxu0 0
        %574 = vmatpush1.bf16.xpose.msra.mxu0 %v565
        %575 = vmatprep.subr.bf16.mxu0 0
        %576 = vmatpush1.bf16.xpose.msra.mxu0 0
        %577 = vmatprep.subr.bf16.mxu0 0
        %578 = vmatpush1.bf16.xpose.msra.mxu0 0
        %579 = vmatprep.subr.bf16.mxu0 0
        %580 = vmatpush1.bf16.xpose.msra.mxu0 0
        %581 = vmatprep.subr.bf16.mxu0 0
        %582 = vmatpush1.bf16.xpose.msra.mxu0 0
        %583 = vmatprep.subr.bf16.mxu0 0
        %584 = vmatpush1.bf16.xpose.msra.mxu0 0
        %585 = vmatprep.subr.bf16.mxu0 0
        %586 = vmatpush1.bf16.xpose.msra.mxu0 0
        %587 = vmatprep.subr.bf16.mxu0 0
        %588 = vmatpush1.bf16.xpose.msra.mxu0 0
        %589 = vmatprep.subr.bf16.mxu0 0
        %590 = vmatpush1.bf16.xpose.msra.mxu0 0
        %591 = vmatprep.subr.bf16.mxu0 0
        %592 = vmatpush1.bf16.xpose.msra.mxu0 0
        %593 = vmatprep.subr.bf16.mxu0 0
        %594 = vmatpush1.bf16.xpose.msra.mxu0 0
        %595 = vmatprep.subr.bf16.mxu0 0
        %596 = vmatpush1.bf16.xpose.msra.mxu0 0
        %597 = vmatprep.subr.bf16.mxu0 0
        %598 = vmatpush1.bf16.xpose.msra.mxu0 0
        %599 = vmatprep.mubr.bf16.mxu0 0
        %600 = vmatmul.mubr.bf16.gmra.mrb[0].mxu0 %v553
        %v601 = vpop.f32.mrb[0].mxu0
        %v602 = vadd.f32 0.0, %v601
        %v603 = vpop.f32.mrb[0].mxu0
        %v604 = vpop.f32.mrb[0].mxu0
        %v605 = vadd.f32 0.0, %v604
        %v606 = vpop.f32.mrb[0].mxu0
        %607 = vdwg.mxu0
        %v616 = vunpack.c.l.b16 %v439
        %v617 = vunpack.c.l.b16 %v440
        %v618 = vunpack.c.l.b16 %v441
        %v619 = vunpack.c.l.b16 %v442
        %v620 = vunpack.c.l.b16 %v443
        %v621 = vunpack.c.l.b16 %v444
        %v622 = vunpack.c.l.b16 %v445
        %v623 = vunpack.c.l.b16 %v446
        %v624 = vpack.c.b16 %v617, %v616
        %v625 = vpack.c.b16 %v619, %v618
        %v626 = vpack.c.b16 %v621, %v620
        %v627 = vpack.c.b16 %v623, %v622
        %v629 = vsel %vm475, %v421, 0
        %v632 = vsel %vm475, %v624, 0
        %v635 = vsel %vm475, %v625, 0
        %v638 = vsel %vm475, %v626, 0
        %v641 = vsel %vm475, %v627, 0
        %643 = vmatprep.subr.bf16.mxu0 0
        %644 = vmatpush1.bf16.xpose.msra.mxu0 %v632
        %645 = vmatprep.subr.bf16.mxu0 0
        %646 = vmatpush1.bf16.xpose.msra.mxu0 %v635
        %647 = vmatprep.subr.bf16.mxu0 0
        %648 = vmatpush1.bf16.xpose.msra.mxu0 %v638
        %649 = vmatprep.subr.bf16.mxu0 0
        %650 = vmatpush1.bf16.xpose.msra.mxu0 %v641
        %651 = vmatprep.subr.bf16.mxu0 0
        %652 = vmatpush1.bf16.xpose.msra.mxu0 0
        %653 = vmatprep.subr.bf16.mxu0 0
        %654 = vmatpush1.bf16.xpose.msra.mxu0 0
        %655 = vmatprep.subr.bf16.mxu0 0
        %656 = vmatpush1.bf16.xpose.msra.mxu0 0
        %657 = vmatprep.subr.bf16.mxu0 0
        %658 = vmatpush1.bf16.xpose.msra.mxu0 0
        %659 = vmatprep.subr.bf16.mxu0 0
        %660 = vmatpush1.bf16.xpose.msra.mxu0 0
        %661 = vmatprep.subr.bf16.mxu0 0
        %662 = vmatpush1.bf16.xpose.msra.mxu0 0
        %663 = vmatprep.subr.bf16.mxu0 0
        %664 = vmatpush1.bf16.xpose.msra.mxu0 0
        %665 = vmatprep.subr.bf16.mxu0 0
        %666 = vmatpush1.bf16.xpose.msra.mxu0 0
        %667 = vmatprep.subr.bf16.mxu0 0
        %668 = vmatpush1.bf16.xpose.msra.mxu0 0
        %669 = vmatprep.subr.bf16.mxu0 0
        %670 = vmatpush1.bf16.xpose.msra.mxu0 0
        %671 = vmatprep.subr.bf16.mxu0 0
        %672 = vmatpush1.bf16.xpose.msra.mxu0 0
        %673 = vmatprep.subr.bf16.mxu0 0
        %674 = vmatpush1.bf16.xpose.msra.mxu0 0
        %675 = vmatprep.mubr.bf16.mxu0 0
        %676 = vmatmul.mubr.bf16.gmra.mrb[0].mxu0 %v629
        %v677 = vpop.f32.mrb[0].mxu0
        %v678 = vadd.f32 0.0, %v677
        %v679 = vpop.f32.mrb[0].mxu0
        %v680 = vpop.f32.mrb[0].mxu0
        %v681 = vadd.f32 0.0, %v680
        %v682 = vpop.f32.mrb[0].mxu0
        %683 = vdwg.mxu0
        %v692 = vunpack.c.l.b16 %v447
        %v693 = vunpack.c.l.b16 %v448
        %v694 = vunpack.c.l.b16 %v449
        %v695 = vunpack.c.l.b16 %v450
        %v696 = vunpack.c.l.b16 %v451
        %v697 = vunpack.c.l.b16 %v452
        %v698 = vunpack.c.l.b16 %v453
        %v699 = vunpack.c.l.b16 %v454
        %v700 = vpack.c.b16 %v693, %v692
        %v701 = vpack.c.b16 %v695, %v694
        %v702 = vpack.c.b16 %v697, %v696
        %v703 = vpack.c.b16 %v699, %v698
        %v705 = vsel %vm475, %v422, 0
        %v708 = vsel %vm475, %v700, 0
        %v711 = vsel %vm475, %v701, 0
        %v714 = vsel %vm475, %v702, 0
        %v717 = vsel %vm475, %v703, 0
        %719 = vmatprep.subr.bf16.mxu0 0
        %720 = vmatpush1.bf16.xpose.msra.mxu0 %v708
        %721 = vmatprep.subr.bf16.mxu0 0
        %722 = vmatpush1.bf16.xpose.msra.mxu0 %v711
        %723 = vmatprep.subr.bf16.mxu0 0
        %724 = vmatpush1.bf16.xpose.msra.mxu0 %v714
        %725 = vmatprep.subr.bf16.mxu0 0
        %726 = vmatpush1.bf16.xpose.msra.mxu0 %v717
        %727 = vmatprep.subr.bf16.mxu0 0
        %728 = vmatpush1.bf16.xpose.msra.mxu0 0
        %729 = vmatprep.subr.bf16.mxu0 0
        %730 = vmatpush1.bf16.xpose.msra.mxu0 0
        %731 = vmatprep.subr.bf16.mxu0 0
        %732 = vmatpush1.bf16.xpose.msra.mxu0 0
        %733 = vmatprep.subr.bf16.mxu0 0
        %734 = vmatpush1.bf16.xpose.msra.mxu0 0
        %735 = vmatprep.subr.bf16.mxu0 0
        %736 = vmatpush1.bf16.xpose.msra.mxu0 0
        %737 = vmatprep.subr.bf16.mxu0 0
        %738 = vmatpush1.bf16.xpose.msra.mxu0 0
        %739 = vmatprep.subr.bf16.mxu0 0
        %740 = vmatpush1.bf16.xpose.msra.mxu0 0
        %741 = vmatprep.subr.bf16.mxu0 0
        %742 = vmatpush1.bf16.xpose.msra.mxu0 0
        %743 = vmatprep.subr.bf16.mxu0 0
        %744 = vmatpush1.bf16.xpose.msra.mxu0 0
        %745 = vmatprep.subr.bf16.mxu0 0
        %746 = vmatpush1.bf16.xpose.msra.mxu0 0
        %747 = vmatprep.subr.bf16.mxu0 0
        %748 = vmatpush1.bf16.xpose.msra.mxu0 0
        %749 = vmatprep.subr.bf16.mxu0 0
        %750 = vmatpush1.bf16.xpose.msra.mxu0 0
        %751 = vmatprep.mubr.bf16.mxu0 0
        %752 = vmatmul.mubr.bf16.gmra.mrb[0].mxu0 %v705
        %v753 = vpop.f32.mrb[0].mxu0
        %v754 = vadd.f32 0.0, %v753
        %v755 = vpop.f32.mrb[0].mxu0
        %v756 = vpop.f32.mrb[0].mxu0
        %v757 = vadd.f32 0.0, %v756
        %v758 = vpop.f32.mrb[0].mxu0
        %759 = vdwg.mxu0
        %v760 = vadd.f32 %v411, %v526
        %v761 = vadd.f32 %v412, %v529
        %v762 = vadd.f32 %v413, %v602
        %v763 = vadd.f32 %v414, %v605
        %v764 = vadd.f32 %v415, %v678
        %v765 = vadd.f32 %v416, %v681
        %v766 = vadd.f32 %v417, %v754
        %v767 = vadd.f32 %v418, %v757
        %v768 = vld [vmem:[%s3] sm:$0x1]
        %v769 = vld [vmem:[%s3 + $0x1] sm:$0x1]
        %v770 = vld [vmem:[%s3 + $0x2] sm:$0x1]
        %v771 = vld [vmem:[%s3 + $0x3] sm:$0x1]
        %v776 = vlaneseq
        %v777 = vshrl.u32 %v776, 7
        %v778 = vsub.s32 0, %v777
        %v779 = vrot.slane %v768, %v778
        %v780 = vlaneseq
        %v781 = vshrl.u32 %v780, 7
        %v782 = vsub.s32 0, %v781
        %v783 = vrot.slane %v769, %v782
        %v784 = vlaneseq
        %v785 = vshrl.u32 %v784, 7
        %v786 = vsub.s32 0, %v785
        %v787 = vrot.slane %v770, %v786
        %v788 = vlaneseq
        %v789 = vshrl.u32 %v788, 7
        %v790 = vsub.s32 0, %v789
        %v791 = vrot.slane %v771, %v790
        %v796 = vadd.f32 %v760, %v779
        %v797 = vadd.f32 %v761, %v779
        %v798 = vadd.f32 %v762, %v783
        %v799 = vadd.f32 %v763, %v783
        %v800 = vadd.f32 %v764, %v787
        %v801 = vadd.f32 %v765, %v787
        %v802 = vadd.f32 %v766, %v791
        %v803 = vadd.f32 %v767, %v791
        %v804 = vld [vmem:[%s4] sm:$0xf]
        %v805 = vld [vmem:[%s4 + $0x4] sm:$0xf]
        %v806 = vld [vmem:[%s4 + $0x8] sm:$0xf]
        %v807 = vld [vmem:[%s4 + $0xc] sm:$0xf]
        %v808 = vpack.c.bf16 %v403, %v402
        %v809 = vpack.c.bf16 %v405, %v404
        %v810 = vpack.c.bf16 %v407, %v406
        %v811 = vpack.c.bf16 %v409, %v408
        %v812 = vld [vmem:[%s5] sm:$0xff]
        %v813 = vld [vmem:[%s5 + $0x8] sm:$0xff]
        %v814 = vld [vmem:[%s5 + $0x10] sm:$0xff]
        %v815 = vld [vmem:[%s5 + $0x18] sm:$0xff]
        %817 = vset.pattern.permute.xlu0 0
        %818 = vperm.xlu0 %817, %v812
        %v819 = vpop.permute.xlu0 %818
        %822 = vset.pattern.permute.xlu0 0
        %823 = vperm.xlu0 %822, %v813
        %v824 = vpop.permute.xlu0 %823
        %827 = vset.pattern.permute.xlu0 0
        %828 = vperm.xlu0 %827, %v814
        %v829 = vpop.permute.xlu0 %828
        %832 = vset.pattern.permute.xlu0 0
        %833 = vperm.xlu0 %832, %v815
        %v834 = vpop.permute.xlu0 %833
        %v840 = vunpack.c.l.b16 %v804
        %v841 = vunpack.c.l.b16 %v805
        %v842 = vunpack.c.l.b16 %v806
        %v843 = vunpack.c.l.b16 %v807
        %v844 = vpack.c.b16 %v841, %v840
        %v845 = vpack.c.b16 %v843, %v842
        %v847 = vsel %vm475, %v844, 0
        %v850 = vsel %vm475, %v845, 0
        %852 = vmatprep.subr.bf16.mxu0 0
        %853 = vmatpush1.bf16.msra.mxu0 %v808
        %854 = vmatprep.subr.bf16.mxu0 0
        %855 = vmatpush1.bf16.msra.mxu0 %v809
        %856 = vmatprep.subr.bf16.mxu0 0
        %857 = vmatpush1.bf16.msra.mxu0 %v810
        %858 = vmatprep.subr.bf16.mxu0 0
        %859 = vmatpush1.bf16.msra.mxu0 %v811
        %860 = vmatprep.subr.bf16.mxu0 0
        %861 = vmatpush1.bf16.msra.mxu0 0
        %862 = vmatprep.subr.bf16.mxu0 0
        %863 = vmatpush1.bf16.msra.mxu0 0
        %864 = vmatprep.subr.bf16.mxu0 0
        %865 = vmatpush1.bf16.msra.mxu0 0
        %866 = vmatprep.subr.bf16.mxu0 0
        %867 = vmatpush1.bf16.msra.mxu0 0
        %868 = vmatprep.subr.bf16.mxu0 0
        %869 = vmatpush1.bf16.msra.mxu0 0
        %870 = vmatprep.subr.bf16.mxu0 0
        %871 = vmatpush1.bf16.msra.mxu0 0
        %872 = vmatprep.subr.bf16.mxu0 0
        %873 = vmatpush1.bf16.msra.mxu0 0
        %874 = vmatprep.subr.bf16.mxu0 0
        %875 = vmatpush1.bf16.msra.mxu0 0
        %876 = vmatprep.subr.bf16.mxu0 0
        %877 = vmatpush1.bf16.msra.mxu0 0
        %878 = vmatprep.subr.bf16.mxu0 0
        %879 = vmatpush1.bf16.msra.mxu0 0
        %880 = vmatprep.subr.bf16.mxu0 0
        %881 = vmatpush1.bf16.msra.mxu0 0
        %882 = vmatprep.subr.bf16.mxu0 0
        %883 = vmatpush1.bf16.msra.mxu0 0
        %884 = vmatprep.mubr.bf16.mxu0 0
        %885 = vmatmul.mubr.bf16.gmra.mrb[0].mxu0 %v847
        %v886 = vpop.f32.mrb[0].mxu0
        %v887 = vadd.f32 %v819, %v886
        %v888 = vpop.f32.mrb[0].mxu0
        %v889 = vpop.f32.mrb[0].mxu0
        %v890 = vadd.f32 %v824, %v889
        %v891 = vpop.f32.mrb[0].mxu0
        %892 = vmatprep.mubr.bf16.mxu0 0
        %893 = vmatmul.mubr.bf16.gmra.mrb[0].mxu0 %v850
        %v894 = vpop.f32.mrb[0].mxu0
        %v895 = vadd.f32 %v829, %v894
        %v896 = vpop.f32.mrb[0].mxu0
        %v897 = vpop.f32.mrb[0].mxu0
        %v898 = vadd.f32 %v834, %v897
        %v899 = vpop.f32.mrb[0].mxu0
        %900 = vdwg.mxu0
        %v901 = vld [vmem:[%s6] sm:$0xf]
        %v902 = vld [vmem:[%s6 + $0x4] sm:$0xf]
        %v903 = vld [vmem:[%s6 + $0x8] sm:$0xf]
        %v904 = vld [vmem:[%s6 + $0xc] sm:$0xf]
        %v905 = vld [vmem:[%s6 + $0x10] sm:$0xf]
        %v906 = vld [vmem:[%s6 + $0x14] sm:$0xf]
        %v907 = vld [vmem:[%s6 + $0x18] sm:$0xf]
        %v908 = vld [vmem:[%s6 + $0x1c] sm:$0xf]
        %v909 = vpack.c.bf16 %v797, %v796
        %v910 = vpack.c.bf16 %v799, %v798
        %v911 = vpack.c.bf16 %v801, %v800
        %v912 = vpack.c.bf16 %v803, %v802
        %v913 = vld [vmem:[%s7] sm:$0xff]
        %v914 = vld [vmem:[%s7 + $0x8] sm:$0xff]
        %v915 = vld [vmem:[%s7 + $0x10] sm:$0xff]
        %v916 = vld [vmem:[%s7 + $0x18] sm:$0xff]
        %v917 = vld [vmem:[%s7 + $0x20] sm:$0xff]
        %v918 = vld [vmem:[%s7 + $0x28] sm:$0xff]
        %v919 = vld [vmem:[%s7 + $0x30] sm:$0xff]
        %v920 = vld [vmem:[%s7 + $0x38] sm:$0xff]
        %922 = vset.pattern.permute.xlu0 0
        %923 = vperm.xlu0 %922, %v913
        %v924 = vpop.permute.xlu0 %923
        %927 = vset.pattern.permute.xlu0 0
        %928 = vperm.xlu0 %927, %v914
        %v929 = vpop.permute.xlu0 %928
        %932 = vset.pattern.permute.xlu0 0
        %933 = vperm.xlu0 %932, %v915
        %v934 = vpop.permute.xlu0 %933
        %937 = vset.pattern.permute.xlu0 0
        %938 = vperm.xlu0 %937, %v916
        %v939 = vpop.permute.xlu0 %938
        %942 = vset.pattern.permute.xlu0 0
        %943 = vperm.xlu0 %942, %v917
        %v944 = vpop.permute.xlu0 %943
        %947 = vset.pattern.permute.xlu0 0
        %948 = vperm.xlu0 %947, %v918
        %v949 = vpop.permute.xlu0 %948
        %952 = vset.pattern.permute.xlu0 0
        %953 = vperm.xlu0 %952, %v919
        %v954 = vpop.permute.xlu0 %953
        %957 = vset.pattern.permute.xlu0 0
        %958 = vperm.xlu0 %957, %v920
        %v959 = vpop.permute.xlu0 %958
        %v969 = vunpack.c.l.b16 %v901
        %v970 = vunpack.c.l.b16 %v902
        %v971 = vunpack.c.l.b16 %v903
        %v972 = vunpack.c.l.b16 %v904
        %v973 = vunpack.c.l.b16 %v905
        %v974 = vunpack.c.l.b16 %v906
        %v975 = vunpack.c.l.b16 %v907
        %v976 = vunpack.c.l.b16 %v908
        %v977 = vpack.c.b16 %v970, %v969
        %v978 = vpack.c.b16 %v972, %v971
        %v979 = vpack.c.b16 %v974, %v973
        %v980 = vpack.c.b16 %v976, %v975
        %v982 = vsel %vm475, %v977, 0
        %v985 = vsel %vm475, %v978, 0
        %v988 = vsel %vm475, %v979, 0
        %v991 = vsel %vm475, %v980, 0
        %993 = vmatprep.subr.bf16.mxu0 0
        %994 = vmatpush1.bf16.msra.mxu0 %v909
        %995 = vmatprep.subr.bf16.mxu0 0
        %996 = vmatpush1.bf16.msra.mxu0 %v910
        %997 = vmatprep.subr.bf16.mxu0 0
        %998 = vmatpush1.bf16.msra.mxu0 %v911
        %999 = vmatprep.subr.bf16.mxu0 0
        %1000 = vmatpush1.bf16.msra.mxu0 %v912
        %1001 = vmatprep.subr.bf16.mxu0 0
        %1002 = vmatpush1.bf16.msra.mxu0 0
        %1003 = vmatprep.subr.bf16.mxu0 0
        %1004 = vmatpush1.bf16.msra.mxu0 0
        %1005 = vmatprep.subr.bf16.mxu0 0
        %1006 = vmatpush1.bf16.msra.mxu0 0
        %1007 = vmatprep.subr.bf16.mxu0 0
        %1008 = vmatpush1.bf16.msra.mxu0 0
        %1009 = vmatprep.subr.bf16.mxu0 0
        %1010 = vmatpush1.bf16.msra.mxu0 0
        %1011 = vmatprep.subr.bf16.mxu0 0
        %1012 = vmatpush1.bf16.msra.mxu0 0
        %1013 = vmatprep.subr.bf16.mxu0 0
        %1014 = vmatpush1.bf16.msra.mxu0 0
        %1015 = vmatprep.subr.bf16.mxu0 0
        %1016 = vmatpush1.bf16.msra.mxu0 0
        %1017 = vmatprep.subr.bf16.mxu0 0
        %1018 = vmatpush1.bf16.msra.mxu0 0
        %1019 = vmatprep.subr.bf16.mxu0 0
        %1020 = vmatpush1.bf16.msra.mxu0 0
        %1021 = vmatprep.subr.bf16.mxu0 0
        %1022 = vmatpush1.bf16.msra.mxu0 0
        %1023 = vmatprep.subr.bf16.mxu0 0
        %1024 = vmatpush1.bf16.msra.mxu0 0
        %1025 = vmatprep.mubr.bf16.mxu0 0
        %1026 = vmatmul.mubr.bf16.gmra.mrb[0].mxu0 %v982
        %v1027 = vpop.f32.mrb[0].mxu0
        %v1028 = vadd.f32 %v924, %v1027
        %v1029 = vpop.f32.mrb[0].mxu0
        %v1030 = vpop.f32.mrb[0].mxu0
        %v1031 = vadd.f32 %v929, %v1030
        %v1032 = vpop.f32.mrb[0].mxu0
        %1033 = vmatprep.mubr.bf16.mxu0 0
        %1034 = vmatmul.mubr.bf16.gmra.mrb[0].mxu0 %v985
        %v1035 = vpop.f32.mrb[0].mxu0
        %v1036 = vadd.f32 %v934, %v1035
        %v1037 = vpop.f32.mrb[0].mxu0
        %v1038 = vpop.f32.mrb[0].mxu0
        %v1039 = vadd.f32 %v939, %v1038
        %v1040 = vpop.f32.mrb[0].mxu0
        %1041 = vmatprep.mubr.bf16.mxu0 0
        %1042 = vmatmul.mubr.bf16.gmra.mrb[0].mxu0 %v988
        %v1043 = vpop.f32.mrb[0].mxu0
        %v1044 = vadd.f32 %v944, %v1043
        %v1045 = vpop.f32.mrb[0].mxu0
        %v1046 = vpop.f32.mrb[0].mxu0
        %v1047 = vadd.f32 %v949, %v1046
        %v1048 = vpop.f32.mrb[0].mxu0
        %1049 = vmatprep.mubr.bf16.mxu0 0
        %1050 = vmatmul.mubr.bf16.gmra.mrb[0].mxu0 %v991
        %v1051 = vpop.f32.mrb[0].mxu0
        %v1052 = vadd.f32 %v954, %v1051
        %v1053 = vpop.f32.mrb[0].mxu0
        %v1054 = vpop.f32.mrb[0].mxu0
        %v1055 = vadd.f32 %v959, %v1054
        %v1056 = vpop.f32.mrb[0].mxu0
        %1057 = vdwg.mxu0
        %v1058 = vpack.c.bf16 %v890, %v887
        %v1059 = vpack.c.bf16 %v898, %v895
        %v1060 = vpack.c.bf16 %v1031, %v1028
        %v1061 = vpack.c.bf16 %v1039, %v1036
        %v1062 = vpack.c.bf16 %v1047, %v1044
        %v1063 = vpack.c.bf16 %v1055, %v1052
        %1064 = vxpose.xlu0.c.b16.start [1/8] %v1058, 128
        %1065 = vxpose.xlu0.c.b16.cont [2/8] 0, 128
        %1066 = vxpose.xlu0.c.b16.cont [3/8] 0, 128
        %1067 = vxpose.xlu0.c.b16.cont [4/8] 0, 128
        %1068 = vxpose.xlu0.c.b16.cont [5/8] 0, 128
        %1069 = vxpose.xlu0.c.b16.cont [6/8] 0, 128
        %1070 = vxpose.xlu0.c.b16.cont [7/8] 0, 128
        %1071 = vxpose.xlu0.c.b16.end [8/8] 0, 128
        %v1072 = vpop.trf.xlu0
        %v1073 = vpop.trf.xlu0
        %v1074 = vpop.trf.xlu0
        %v1075 = vpop.trf.xlu0
        %v1076 = vpop.trf.xlu0
        %v1077 = vpop.trf.xlu0
        %v1078 = vpop.trf.xlu0
        %v1079 = vpop.trf.xlu0
        %vm1080 = vcmask 64512
        %v1082 = vsel %vm1080, %v1072, 0
        %v1085 = vsel %vm1080, %v1073, 0
        %v1088 = vsel %vm1080, %v1074, 0
        %v1091 = vsel %vm1080, %v1075, 0
        %vm1093 = vcmask 1043456
        %v1095 = vsel %vm1093, %v1060, 0
        %1097 = vmatprep.subr.bf16.mxu0 0
        %1098 = vmatpush1.bf16.msra.mxu0 %v1095
        %1099 = vmatprep.subr.bf16.mxu0 0
        %1100 = vmatpush1.bf16.msra.mxu0 0
        %1101 = vmatprep.subr.bf16.mxu0 0
        %1102 = vmatpush1.bf16.msra.mxu0 0
        %1103 = vmatprep.subr.bf16.mxu0 0
        %1104 = vmatpush1.bf16.msra.mxu0 0
        %1105 = vmatprep.subr.bf16.mxu0 0
        %1106 = vmatpush1.bf16.msra.mxu0 0
        %1107 = vmatprep.subr.bf16.mxu0 0
        %1108 = vmatpush1.bf16.msra.mxu0 0
        %1109 = vmatprep.subr.bf16.mxu0 0
        %1110 = vmatpush1.bf16.msra.mxu0 0
        %1111 = vmatprep.subr.bf16.mxu0 0
        %1112 = vmatpush1.bf16.msra.mxu0 0
        %1113 = vmatprep.subr.bf16.mxu0 0
        %1114 = vmatpush1.bf16.msra.mxu0 0
        %1115 = vmatprep.subr.bf16.mxu0 0
        %1116 = vmatpush1.bf16.msra.mxu0 0
        %1117 = vmatprep.subr.bf16.mxu0 0
        %1118 = vmatpush1.bf16.msra.mxu0 0
        %1119 = vmatprep.subr.bf16.mxu0 0
        %1120 = vmatpush1.bf16.msra.mxu0 0
        %1121 = vmatprep.subr.bf16.mxu0 0
        %1122 = vmatpush1.bf16.msra.mxu0 0
        %1123 = vmatprep.subr.bf16.mxu0 0
        %1124 = vmatpush1.bf16.msra.mxu0 0
        %1125 = vmatprep.subr.bf16.mxu0 0
        %1126 = vmatpush1.bf16.msra.mxu0 0
        %1127 = vmatprep.subr.bf16.mxu0 0
        %1128 = vmatpush1.bf16.msra.mxu0 0
        %1129 = vmatprep.mubr.bf16.mxu0 0
        %1130 = vmatmul.mubr.bf16.gmra.mrb[0].mxu0 %v1082
        %v1131 = vpop.f32.mrb[0].mxu0
        %v1132 = vadd.f32 0.0, %v1131
        %v1133 = vpop.f32.mrb[0].mxu0
        %v1134 = vpop.f32.mrb[0].mxu0
        %v1135 = vadd.f32 0.0, %v1134
        %v1136 = vpop.f32.mrb[0].mxu0
        %1137 = vmatprep.mubr.bf16.mxu0 0
        %1138 = vmatmul.mubr.bf16.gmra.mrb[0].mxu0 %v1085
        %v1139 = vpop.f32.mrb[0].mxu0
        %v1140 = vadd.f32 0.0, %v1139
        %v1141 = vpop.f32.mrb[0].mxu0
        %v1142 = vpop.f32.mrb[0].mxu0
        %v1143 = vadd.f32 0.0, %v1142
        %v1144 = vpop.f32.mrb[0].mxu0
        %1145 = vmatprep.mubr.bf16.mxu0 0
        %1146 = vmatmul.mubr.bf16.gmra.mrb[0].mxu0 %v1088
        %v1147 = vpop.f32.mrb[0].mxu0
        %v1148 = vadd.f32 0.0, %v1147
        %v1149 = vpop.f32.mrb[0].mxu0
        %v1150 = vpop.f32.mrb[0].mxu0
        %v1151 = vadd.f32 0.0, %v1150
        %v1152 = vpop.f32.mrb[0].mxu0
        %1153 = vmatprep.mubr.bf16.mxu0 0
        %1154 = vmatmul.mubr.bf16.gmra.mrb[0].mxu0 %v1091
        %v1155 = vpop.f32.mrb[0].mxu0
        %v1156 = vadd.f32 0.0, %v1155
        %v1157 = vpop.f32.mrb[0].mxu0
        %v1158 = vpop.f32.mrb[0].mxu0
        %v1159 = vadd.f32 0.0, %v1158
        %v1160 = vpop.f32.mrb[0].mxu0
        %1161 = vdwg.mxu0
        %v1162 = vmul.f32 %v1132, 0.35355338
        %v1163 = vmul.f32 %v1135, 0.35355338
        %v1164 = vmul.f32 %v1140, 0.35355338
        %v1165 = vmul.f32 %v1143, 0.35355338
        %v1166 = vmul.f32 %v1148, 0.35355338
        %v1167 = vmul.f32 %v1151, 0.35355338
        %v1168 = vmul.f32 %v1156, 0.35355338
        %v1169 = vmul.f32 %v1159, 0.35355338
        %v1170 = vsel %vm475, %v1162, -inf
        %1171 = vmax.xlane.f32.xlu0 %v1170
        %v1172 = vpop.xlane.xlu0 %1171
        %v1173 = vsel %vm475, %v1163, -inf
        %1174 = vmax.xlane.f32.xlu0 %v1173
        %v1175 = vpop.xlane.xlu0 %1174
        %v1176 = vsel %vm475, %v1164, -inf
        %1177 = vmax.xlane.f32.xlu0 %v1176
        %v1178 = vpop.xlane.xlu0 %1177
        %v1179 = vsel %vm475, %v1165, -inf
        %1180 = vmax.xlane.f32.xlu0 %v1179
        %v1181 = vpop.xlane.xlu0 %1180
        %v1182 = vsel %vm475, %v1166, -inf
        %1183 = vmax.xlane.f32.xlu0 %v1182
        %v1184 = vpop.xlane.xlu0 %1183
        %v1185 = vsel %vm475, %v1167, -inf
        %1186 = vmax.xlane.f32.xlu0 %v1185
        %v1187 = vpop.xlane.xlu0 %1186
        %v1188 = vsel %vm475, %v1168, -inf
        %1189 = vmax.xlane.f32.xlu0 %v1188
        %v1190 = vpop.xlane.xlu0 %1189
        %v1191 = vsel %vm475, %v1169, -inf
        %1192 = vmax.xlane.f32.xlu0 %v1191
        %v1193 = vpop.xlane.xlu0 %1192
        %v1194 = vsub.f32 %v1162, %v1172
        %v1195 = vsub.f32 %v1163, %v1175
        %v1196 = vsub.f32 %v1164, %v1178
        %v1197 = vsub.f32 %v1165, %v1181
        %v1198 = vsub.f32 %v1166, %v1184
        %v1199 = vsub.f32 %v1167, %v1187
        %v1200 = vsub.f32 %v1168, %v1190
        %v1201 = vsub.f32 %v1169, %v1193
        %v1202 = vmul.f32 %v1194, 1.442695
        %v1203 = vpow.pop %v1202
        %v1204 = vmul.f32 %v1195, 1.442695
        %v1205 = vpow.pop %v1204
        %v1206 = vmul.f32 %v1196, 1.442695
        %v1207 = vpow.pop %v1206
        %v1208 = vmul.f32 %v1197, 1.442695
        %v1209 = vpow.pop %v1208
        %v1210 = vmul.f32 %v1198, 1.442695
        %v1211 = vpow.pop %v1210
        %v1212 = vmul.f32 %v1199, 1.442695
        %v1213 = vpow.pop %v1212
        %v1214 = vmul.f32 %v1200, 1.442695
        %v1215 = vpow.pop %v1214
        %v1216 = vmul.f32 %v1201, 1.442695
        %v1217 = vpow.pop %v1216
        %v1218 = vsel %vm475, %v1203, 0.0
        %1219 = vadd.xlane.f32.xlu0 %v1218
        %v1220 = vpop.xlane.xlu0 %1219
        %v1221 = vsel %vm475, %v1205, 0.0
        %1222 = vadd.xlane.f32.xlu0 %v1221
        %v1223 = vpop.xlane.xlu0 %1222
        %v1224 = vsel %vm475, %v1207, 0.0
        %1225 = vadd.xlane.f32.xlu0 %v1224
        %v1226 = vpop.xlane.xlu0 %1225
        %v1227 = vsel %vm475, %v1209, 0.0
        %1228 = vadd.xlane.f32.xlu0 %v1227
        %v1229 = vpop.xlane.xlu0 %1228
        %v1230 = vsel %vm475, %v1211, 0.0
        %1231 = vadd.xlane.f32.xlu0 %v1230
        %v1232 = vpop.xlane.xlu0 %1231
        %v1233 = vsel %vm475, %v1213, 0.0
        %1234 = vadd.xlane.f32.xlu0 %v1233
        %v1235 = vpop.xlane.xlu0 %1234
        %v1236 = vsel %vm475, %v1215, 0.0
        %1237 = vadd.xlane.f32.xlu0 %v1236
        %v1238 = vpop.xlane.xlu0 %1237
        %v1239 = vsel %vm475, %v1217, 0.0
        %1240 = vadd.xlane.f32.xlu0 %v1239
        %v1241 = vpop.xlane.xlu0 %1240
        %v1242 = vrcp.pop %v1220
        %v1243 = vrcp.pop %v1223
        %v1244 = vrcp.pop %v1226
        %v1245 = vrcp.pop %v1229
        %v1246 = vrcp.pop %v1232
        %v1247 = vrcp.pop %v1235
        %v1248 = vrcp.pop %v1238
        %v1249 = vrcp.pop %v1241
        %v1250 = vmul.f32 %v1203, %v1242
        %v1251 = vmul.f32 %v1205, %v1243
        %v1252 = vmul.f32 %v1207, %v1244
        %v1253 = vmul.f32 %v1209, %v1245
        %v1254 = vmul.f32 %v1211, %v1246
        %v1255 = vmul.f32 %v1213, %v1247
        %v1256 = vmul.f32 %v1215, %v1248
        %v1257 = vmul.f32 %v1217, %v1249
        %v1258 = vpack.c.bf16 %v1251, %v1250
        %v1259 = vpack.c.bf16 %v1253, %v1252
        %v1260 = vpack.c.bf16 %v1255, %v1254
        %v1261 = vpack.c.bf16 %v1257, %v1256
        %v1263 = vsel %vm475, %v1062, 0
        %v1266 = vsel %vm475, %v1258, 0
        %v1269 = vsel %vm475, %v1259, 0
        %v1272 = vsel %vm475, %v1260, 0
        %v1275 = vsel %vm475, %v1261, 0
        %1277 = vmatprep.subr.bf16.mxu0 0
        %1278 = vmatpush1.bf16.xpose.msra.mxu0 %v1266
        %1279 = vmatprep.subr.bf16.mxu0 0
        %1280 = vmatpush1.bf16.xpose.msra.mxu0 %v1269
        %1281 = vmatprep.subr.bf16.mxu0 0
        %1282 = vmatpush1.bf16.xpose.msra.mxu0 %v1272
        %1283 = vmatprep.subr.bf16.mxu0 0
        %1284 = vmatpush1.bf16.xpose.msra.mxu0 %v1275
        %1285 = vmatprep.subr.bf16.mxu0 0
        %1286 = vmatpush1.bf16.xpose.msra.mxu0 0
        %1287 = vmatprep.subr.bf16.mxu0 0
        %1288 = vmatpush1.bf16.xpose.msra.mxu0 0
        %1289 = vmatprep.subr.bf16.mxu0 0
        %1290 = vmatpush1.bf16.xpose.msra.mxu0 0
        %1291 = vmatprep.subr.bf16.mxu0 0
        %1292 = vmatpush1.bf16.xpose.msra.mxu0 0
        %1293 = vmatprep.subr.bf16.mxu0 0
        %1294 = vmatpush1.bf16.xpose.msra.mxu0 0
        %1295 = vmatprep.subr.bf16.mxu0 0
        %1296 = vmatpush1.bf16.xpose.msra.mxu0 0
        %1297 = vmatprep.subr.bf16.mxu0 0
        %1298 = vmatpush1.bf16.xpose.msra.mxu0 0
        %1299 = vmatprep.subr.bf16.mxu0 0
        %1300 = vmatpush1.bf16.xpose.msra.mxu0 0
        %1301 = vmatprep.subr.bf16.mxu0 0
        %1302 = vmatpush1.bf16.xpose.msra.mxu0 0
        %1303 = vmatprep.subr.bf16.mxu0 0
        %1304 = vmatpush1.bf16.xpose.msra.mxu0 0
        %1305 = vmatprep.subr.bf16.mxu0 0
        %1306 = vmatpush1.bf16.xpose.msra.mxu0 0
        %1307 = vmatprep.subr.bf16.mxu0 0
        %1308 = vmatpush1.bf16.xpose.msra.mxu0 0
        %1309 = vmatprep.mubr.bf16.mxu0 0
        %1310 = vmatmul.mubr.bf16.gmra.mrb[0].mxu0 %v1263
        %v1311 = vpop.f32.mrb[0].mxu0
        %v1312 = vadd.f32 0.0, %v1311
        %v1313 = vpop.f32.mrb[0].mxu0
        %v1314 = vpop.f32.mrb[0].mxu0
        %v1315 = vpop.f32.mrb[0].mxu0
        %1316 = vdwg.mxu0
        %v1318 = vrot.slane %v1058, 4
        %1320 = vxpose.xlu0.c.b16.start [1/8] %v1318, 128
        %1321 = vxpose.xlu0.c.b16.cont [2/8] 0, 128
        %1322 = vxpose.xlu0.c.b16.cont [3/8] 0, 128
        %1323 = vxpose.xlu0.c.b16.cont [4/8] 0, 128
        %1324 = vxpose.xlu0.c.b16.cont [5/8] 0, 128
        %1325 = vxpose.xlu0.c.b16.cont [6/8] 0, 128
        %1326 = vxpose.xlu0.c.b16.cont [7/8] 0, 128
        %1327 = vxpose.xlu0.c.b16.end [8/8] 0, 128
        %v1328 = vpop.trf.xlu0
        %v1329 = vpop.trf.xlu0
        %v1330 = vpop.trf.xlu0
        %v1331 = vpop.trf.xlu0
        %v1332 = vpop.trf.xlu0
        %v1333 = vpop.trf.xlu0
        %v1334 = vpop.trf.xlu0
        %v1335 = vpop.trf.xlu0
        %v1337 = vrot.slane %v1060, 4
        %v1339 = vsel %vm1080, %v1328, 0
        %v1342 = vsel %vm1080, %v1329, 0
        %v1345 = vsel %vm1080, %v1330, 0
        %v1348 = vsel %vm1080, %v1331, 0
        %v1351 = vsel %vm1093, %v1337, 0
        %1353 = vmatprep.subr.bf16.mxu0 0
        %1354 = vmatpush1.bf16.msra.mxu0 %v1351
        %1355 = vmatprep.subr.bf16.mxu0 0
        %1356 = vmatpush1.bf16.msra.mxu0 0
        %1357 = vmatprep.subr.bf16.mxu0 0
        %1358 = vmatpush1.bf16.msra.mxu0 0
        %1359 = vmatprep.subr.bf16.mxu0 0
        %1360 = vmatpush1.bf16.msra.mxu0 0
        %1361 = vmatprep.subr.bf16.mxu0 0
        %1362 = vmatpush1.bf16.msra.mxu0 0
        %1363 = vmatprep.subr.bf16.mxu0 0
        %1364 = vmatpush1.bf16.msra.mxu0 0
        %1365 = vmatprep.subr.bf16.mxu0 0
        %1366 = vmatpush1.bf16.msra.mxu0 0
        %1367 = vmatprep.subr.bf16.mxu0 0
        %1368 = vmatpush1.bf16.msra.mxu0 0
        %1369 = vmatprep.subr.bf16.mxu0 0
        %1370 = vmatpush1.bf16.msra.mxu0 0
        %1371 = vmatprep.subr.bf16.mxu0 0
        %1372 = vmatpush1.bf16.msra.mxu0 0
        %1373 = vmatprep.subr.bf16.mxu0 0
        %1374 = vmatpush1.bf16.msra.mxu0 0
        %1375 = vmatprep.subr.bf16.mxu0 0
        %1376 = vmatpush1.bf16.msra.mxu0 0
        %1377 = vmatprep.subr.bf16.mxu0 0
        %1378 = vmatpush1.bf16.msra.mxu0 0
        %1379 = vmatprep.subr.bf16.mxu0 0
        %1380 = vmatpush1.bf16.msra.mxu0 0
        %1381 = vmatprep.subr.bf16.mxu0 0
        %1382 = vmatpush1.bf16.msra.mxu0 0
        %1383 = vmatprep.subr.bf16.mxu0 0
        %1384 = vmatpush1.bf16.msra.mxu0 0
        %1385 = vmatprep.mubr.bf16.mxu0 0
        %1386 = vmatmul.mubr.bf16.gmra.mrb[0].mxu0 %v1339
        %v1387 = vpop.f32.mrb[0].mxu0
        %v1388 = vadd.f32 0.0, %v1387
        %v1389 = vpop.f32.mrb[0].mxu0
        %v1390 = vpop.f32.mrb[0].mxu0
        %v1391 = vadd.f32 0.0, %v1390
        %v1392 = vpop.f32.mrb[0].mxu0
        %1393 = vmatprep.mubr.bf16.mxu0 0
        %1394 = vmatmul.mubr.bf16.gmra.mrb[0].mxu0 %v1342
        %v1395 = vpop.f32.mrb[0].mxu0
        %v1396 = vadd.f32 0.0, %v1395
        %v1397 = vpop.f32.mrb[0].mxu0
        %v1398 = vpop.f32.mrb[0].mxu0
        %v1399 = vadd.f32 0.0, %v1398
        %v1400 = vpop.f32.mrb[0].mxu0
        %1401 = vmatprep.mubr.bf16.mxu0 0
        %1402 = vmatmul.mubr.bf16.gmra.mrb[0].mxu0 %v1345
        %v1403 = vpop.f32.mrb[0].mxu0
        %v1404 = vadd.f32 0.0, %v1403
        %v1405 = vpop.f32.mrb[0].mxu0
        %v1406 = vpop.f32.mrb[0].mxu0
        %v1407 = vadd.f32 0.0, %v1406
        %v1408 = vpop.f32.mrb[0].mxu0
        %1409 = vmatprep.mubr.bf16.mxu0 0
        %1410 = vmatmul.mubr.bf16.gmra.mrb[0].mxu0 %v1348
        %v1411 = vpop.f32.mrb[0].mxu0
        %v1412 = vadd.f32 0.0, %v1411
        %v1413 = vpop.f32.mrb[0].mxu0
        %v1414 = vpop.f32.mrb[0].mxu0
        %v1415 = vadd.f32 0.0, %v1414
        %v1416 = vpop.f32.mrb[0].mxu0
        %1417 = vdwg.mxu0
        %v1418 = vmul.f32 %v1388, 0.35355338
        %v1419 = vmul.f32 %v1391, 0.35355338
        %v1420 = vmul.f32 %v1396, 0.35355338
        %v1421 = vmul.f32 %v1399, 0.35355338
        %v1422 = vmul.f32 %v1404, 0.35355338
        %v1423 = vmul.f32 %v1407, 0.35355338
        %v1424 = vmul.f32 %v1412, 0.35355338
        %v1425 = vmul.f32 %v1415, 0.35355338
        %v1426 = vsel %vm475, %v1418, -inf
        %1427 = vmax.xlane.f32.xlu0 %v1426
        %v1428 = vpop.xlane.xlu0 %1427
        %v1429 = vsel %vm475, %v1419, -inf
        %1430 = vmax.xlane.f32.xlu0 %v1429
        %v1431 = vpop.xlane.xlu0 %1430
        %v1432 = vsel %vm475, %v1420, -inf
        %1433 = vmax.xlane.f32.xlu0 %v1432
        %v1434 = vpop.xlane.xlu0 %1433
        %v1435 = vsel %vm475, %v1421, -inf
        %1436 = vmax.xlane.f32.xlu0 %v1435
        %v1437 = vpop.xlane.xlu0 %1436
        %v1438 = vsel %vm475, %v1422, -inf
        %1439 = vmax.xlane.f32.xlu0 %v1438
        %v1440 = vpop.xlane.xlu0 %1439
        %v1441 = vsel %vm475, %v1423, -inf
        %1442 = vmax.xlane.f32.xlu0 %v1441
        %v1443 = vpop.xlane.xlu0 %1442
        %v1444 = vsel %vm475, %v1424, -inf
        %1445 = vmax.xlane.f32.xlu0 %v1444
        %v1446 = vpop.xlane.xlu0 %1445
        %v1447 = vsel %vm475, %v1425, -inf
        %1448 = vmax.xlane.f32.xlu0 %v1447
        %v1449 = vpop.xlane.xlu0 %1448
        %v1450 = vsub.f32 %v1418, %v1428
        %v1451 = vsub.f32 %v1419, %v1431
        %v1452 = vsub.f32 %v1420, %v1434
        %v1453 = vsub.f32 %v1421, %v1437
        %v1454 = vsub.f32 %v1422, %v1440
        %v1455 = vsub.f32 %v1423, %v1443
        %v1456 = vsub.f32 %v1424, %v1446
        %v1457 = vsub.f32 %v1425, %v1449
        %v1458 = vmul.f32 %v1450, 1.442695
        %v1459 = vpow.pop %v1458
        %v1460 = vmul.f32 %v1451, 1.442695
        %v1461 = vpow.pop %v1460
        %v1462 = vmul.f32 %v1452, 1.442695
        %v1463 = vpow.pop %v1462
        %v1464 = vmul.f32 %v1453, 1.442695
        %v1465 = vpow.pop %v1464
        %v1466 = vmul.f32 %v1454, 1.442695
        %v1467 = vpow.pop %v1466
        %v1468 = vmul.f32 %v1455, 1.442695
        %v1469 = vpow.pop %v1468
        %v1470 = vmul.f32 %v1456, 1.442695
        %v1471 = vpow.pop %v1470
        %v1472 = vmul.f32 %v1457, 1.442695
        %v1473 = vpow.pop %v1472
        %v1474 = vsel %vm475, %v1459, 0.0
        %1475 = vadd.xlane.f32.xlu0 %v1474
        %v1476 = vpop.xlane.xlu0 %1475
        %v1477 = vsel %vm475, %v1461, 0.0
        %1478 = vadd.xlane.f32.xlu0 %v1477
        %v1479 = vpop.xlane.xlu0 %1478
        %v1480 = vsel %vm475, %v1463, 0.0
        %1481 = vadd.xlane.f32.xlu0 %v1480
        %v1482 = vpop.xlane.xlu0 %1481
        %v1483 = vsel %vm475, %v1465, 0.0
        %1484 = vadd.xlane.f32.xlu0 %v1483
        %v1485 = vpop.xlane.xlu0 %1484
        %v1486 = vsel %vm475, %v1467, 0.0
        %1487 = vadd.xlane.f32.xlu0 %v1486
        %v1488 = vpop.xlane.xlu0 %1487
        %v1489 = vsel %vm475, %v1469, 0.0
        %1490 = vadd.xlane.f32.xlu0 %v1489
        %v1491 = vpop.xlane.xlu0 %1490
        %v1492 = vsel %vm475, %v1471, 0.0
        %1493 = vadd.xlane.f32.xlu0 %v1492
        %v1494 = vpop.xlane.xlu0 %1493
        %v1495 = vsel %vm475, %v1473, 0.0
        %1496 = vadd.xlane.f32.xlu0 %v1495
        %v1497 = vpop.xlane.xlu0 %1496
        %v1498 = vrcp.pop %v1476
        %v1499 = vrcp.pop %v1479
        %v1500 = vrcp.pop %v1482
        %v1501 = vrcp.pop %v1485
        %v1502 = vrcp.pop %v1488
        %v1503 = vrcp.pop %v1491
        %v1504 = vrcp.pop %v1494
        %v1505 = vrcp.pop %v1497
        %v1506 = vmul.f32 %v1459, %v1498
        %v1507 = vmul.f32 %v1461, %v1499
        %v1508 = vmul.f32 %v1463, %v1500
        %v1509 = vmul.f32 %v1465, %v1501
        %v1510 = vmul.f32 %v1467, %v1502
        %v1511 = vmul.f32 %v1469, %v1503
        %v1512 = vmul.f32 %v1471, %v1504
        %v1513 = vmul.f32 %v1473, %v1505
        %v1514 = vpack.c.bf16 %v1507, %v1506
        %v1515 = vpack.c.bf16 %v1509, %v1508
        %v1516 = vpack.c.bf16 %v1511, %v1510
        %v1517 = vpack.c.bf16 %v1513, %v1512
        %v1519 = vrot.slane %v1062, 4
        %v1521 = vsel %vm475, %v1519, 0
        %v1524 = vsel %vm475, %v1514, 0
        %v1527 = vsel %vm475, %v1515, 0
        %v1530 = vsel %vm475, %v1516, 0
        %v1533 = vsel %vm475, %v1517, 0
        %1535 = vmatprep.subr.bf16.mxu0 0
        %1536 = vmatpush1.bf16.xpose.msra.mxu0 %v1524
        %1537 = vmatprep.subr.bf16.mxu0 0
        %1538 = vmatpush1.bf16.xpose.msra.mxu0 %v1527
        %1539 = vmatprep.subr.bf16.mxu0 0
        %1540 = vmatpush1.bf16.xpose.msra.mxu0 %v1530
        %1541 = vmatprep.subr.bf16.mxu0 0
        %1542 = vmatpush1.bf16.xpose.msra.mxu0 %v1533
        %1543 = vmatprep.subr.bf16.mxu0 0
        %1544 = vmatpush1.bf16.xpose.msra.mxu0 0
        %1545 = vmatprep.subr.bf16.mxu0 0
        %1546 = vmatpush1.bf16.xpose.msra.mxu0 0
        %1547 = vmatprep.subr.bf16.mxu0 0
        %1548 = vmatpush1.bf16.xpose.msra.mxu0 0
        %1549 = vmatprep.subr.bf16.mxu0 0
        %1550 = vmatpush1.bf16.xpose.msra.mxu0 0
        %1551 = vmatprep.subr.bf16.mxu0 0
        %1552 = vmatpush1.bf16.xpose.msra.mxu0 0
        %1553 = vmatprep.subr.bf16.mxu0 0
        %1554 = vmatpush1.bf16.xpose.msra.mxu0 0
        %1555 = vmatprep.subr.bf16.mxu0 0
        %1556 = vmatpush1.bf16.xpose.msra.mxu0 0
        %1557 = vmatprep.subr.bf16.mxu0 0
        %1558 = vmatpush1.bf16.xpose.msra.mxu0 0
        %1559 = vmatprep.subr.bf16.mxu0 0
        %1560 = vmatpush1.bf16.xpose.msra.mxu0 0
        %1561 = vmatprep.subr.bf16.mxu0 0
        %1562 = vmatpush1.bf16.xpose.msra.mxu0 0
        %1563 = vmatprep.subr.bf16.mxu0 0
        %1564 = vmatpush1.bf16.xpose.msra.mxu0 0
        %1565 = vmatprep.subr.bf16.mxu0 0
        %1566 = vmatpush1.bf16.xpose.msra.mxu0 0
        %1567 = vmatprep.mubr.bf16.mxu0 0
        %1568 = vmatmul.mubr.bf16.gmra.mrb[0].mxu0 %v1521
        %v1569 = vpop.f32.mrb[0].mxu0
        %v1570 = vadd.f32 0.0, %v1569
        %v1571 = vpop.f32.mrb[0].mxu0
        %v1572 = vpop.f32.mrb[0].mxu0
        %v1573 = vpop.f32.mrb[0].mxu0
        %1574 = vdwg.mxu0
        %1575 = vxpose.xlu0.c.b16.start [1/8] %v1059, 128
        %1576 = vxpose.xlu0.c.b16.cont [2/8] 0, 128
        %1577 = vxpose.xlu0.c.b16.cont [3/8] 0, 128
        %1578 = vxpose.xlu0.c.b16.cont [4/8] 0, 128
        %1579 = vxpose.xlu0.c.b16.cont [5/8] 0, 128
        %1580 = vxpose.xlu0.c.b16.cont [6/8] 0, 128
        %1581 = vxpose.xlu0.c.b16.cont [7/8] 0, 128
        %1582 = vxpose.xlu0.c.b16.end [8/8] 0, 128
        %v1583 = vpop.trf.xlu0
        %v1584 = vpop.trf.xlu0
        %v1585 = vpop.trf.xlu0
        %v1586 = vpop.trf.xlu0
        %v1587 = vpop.trf.xlu0
        %v1588 = vpop.trf.xlu0
        %v1589 = vpop.trf.xlu0
        %v1590 = vpop.trf.xlu0
        %v1592 = vsel %vm1080, %v1583, 0
        %v1595 = vsel %vm1080, %v1584, 0
        %v1598 = vsel %vm1080, %v1585, 0
        %v1601 = vsel %vm1080, %v1586, 0
        %v1604 = vsel %vm1093, %v1061, 0
        %1606 = vmatprep.subr.bf16.mxu0 0
        %1607 = vmatpush1.bf16.msra.mxu0 %v1604
        %1608 = vmatprep.subr.bf16.mxu0 0
        %1609 = vmatpush1.bf16.msra.mxu0 0
        %1610 = vmatprep.subr.bf16.mxu0 0
        %1611 = vmatpush1.bf16.msra.mxu0 0
        %1612 = vmatprep.subr.bf16.mxu0 0
        %1613 = vmatpush1.bf16.msra.mxu0 0
        %1614 = vmatprep.subr.bf16.mxu0 0
        %1615 = vmatpush1.bf16.msra.mxu0 0
        %1616 = vmatprep.subr.bf16.mxu0 0
        %1617 = vmatpush1.bf16.msra.mxu0 0
        %1618 = vmatprep.subr.bf16.mxu0 0
        %1619 = vmatpush1.bf16.msra.mxu0 0
        %1620 = vmatprep.subr.bf16.mxu0 0
        %1621 = vmatpush1.bf16.msra.mxu0 0
        %1622 = vmatprep.subr.bf16.mxu0 0
        %1623 = vmatpush1.bf16.msra.mxu0 0
        %1624 = vmatprep.subr.bf16.mxu0 0
        %1625 = vmatpush1.bf16.msra.mxu0 0
        %1626 = vmatprep.subr.bf16.mxu0 0
        %1627 = vmatpush1.bf16.msra.mxu0 0
        %1628 = vmatprep.subr.bf16.mxu0 0
        %1629 = vmatpush1.bf16.msra.mxu0 0
        %1630 = vmatprep.subr.bf16.mxu0 0
        %1631 = vmatpush1.bf16.msra.mxu0 0
        %1632 = vmatprep.subr.bf16.mxu0 0
        %1633 = vmatpush1.bf16.msra.mxu0 0
        %1634 = vmatprep.subr.bf16.mxu0 0
        %1635 = vmatpush1.bf16.msra.mxu0 0
        %1636 = vmatprep.subr.bf16.mxu0 0
        %1637 = vmatpush1.bf16.msra.mxu0 0
        %1638 = vmatprep.mubr.bf16.mxu0 0
        %1639 = vmatmul.mubr.bf16.gmra.mrb[0].mxu0 %v1592
        %v1640 = vpop.f32.mrb[0].mxu0
        %v1641 = vadd.f32 0.0, %v1640
        %v1642 = vpop.f32.mrb[0].mxu0
        %v1643 = vpop.f32.mrb[0].mxu0
        %v1644 = vadd.f32 0.0, %v1643
        %v1645 = vpop.f32.mrb[0].mxu0
        %1646 = vmatprep.mubr.bf16.mxu0 0
        %1647 = vmatmul.mubr.bf16.gmra.mrb[0].mxu0 %v1595
        %v1648 = vpop.f32.mrb[0].mxu0
        %v1649 = vadd.f32 0.0, %v1648
        %v1650 = vpop.f32.mrb[0].mxu0
        %v1651 = vpop.f32.mrb[0].mxu0
        %v1652 = vadd.f32 0.0, %v1651
        %v1653 = vpop.f32.mrb[0].mxu0
        %1654 = vmatprep.mubr.bf16.mxu0 0
        %1655 = vmatmul.mubr.bf16.gmra.mrb[0].mxu0 %v1598
        %v1656 = vpop.f32.mrb[0].mxu0
        %v1657 = vadd.f32 0.0, %v1656
        %v1658 = vpop.f32.mrb[0].mxu0
        %v1659 = vpop.f32.mrb[0].mxu0
        %v1660 = vadd.f32 0.0, %v1659
        %v1661 = vpop.f32.mrb[0].mxu0
        %1662 = vmatprep.mubr.bf16.mxu0 0
        %1663 = vmatmul.mubr.bf16.gmra.mrb[0].mxu0 %v1601
        %v1664 = vpop.f32.mrb[0].mxu0
        %v1665 = vadd.f32 0.0, %v1664
        %v1666 = vpop.f32.mrb[0].mxu0
        %v1667 = vpop.f32.mrb[0].mxu0
        %v1668 = vadd.f32 0.0, %v1667
        %v1669 = vpop.f32.mrb[0].mxu0
        %1670 = vdwg.mxu0
        %v1671 = vmul.f32 %v1641, 0.35355338
        %v1672 = vmul.f32 %v1644, 0.35355338
        %v1673 = vmul.f32 %v1649, 0.35355338
        %v1674 = vmul.f32 %v1652, 0.35355338
        %v1675 = vmul.f32 %v1657, 0.35355338
        %v1676 = vmul.f32 %v1660, 0.35355338
        %v1677 = vmul.f32 %v1665, 0.35355338
        %v1678 = vmul.f32 %v1668, 0.35355338
        %v1679 = vsel %vm475, %v1671, -inf
        %1680 = vmax.xlane.f32.xlu0 %v1679
        %v1681 = vpop.xlane.xlu0 %1680
        %v1682 = vsel %vm475, %v1672, -inf
        %1683 = vmax.xlane.f32.xlu0 %v1682
        %v1684 = vpop.xlane.xlu0 %1683
        %v1685 = vsel %vm475, %v1673, -inf
        %1686 = vmax.xlane.f32.xlu0 %v1685
        %v1687 = vpop.xlane.xlu0 %1686
        %v1688 = vsel %vm475, %v1674, -inf
        %1689 = vmax.xlane.f32.xlu0 %v1688
        %v1690 = vpop.xlane.xlu0 %1689
        %v1691 = vsel %vm475, %v1675, -inf
        %1692 = vmax.xlane.f32.xlu0 %v1691
        %v1693 = vpop.xlane.xlu0 %1692
        %v1694 = vsel %vm475, %v1676, -inf
        %1695 = vmax.xlane.f32.xlu0 %v1694
        %v1696 = vpop.xlane.xlu0 %1695
        %v1697 = vsel %vm475, %v1677, -inf
        %1698 = vmax.xlane.f32.xlu0 %v1697
        %v1699 = vpop.xlane.xlu0 %1698
        %v1700 = vsel %vm475, %v1678, -inf
        %1701 = vmax.xlane.f32.xlu0 %v1700
        %v1702 = vpop.xlane.xlu0 %1701
        %v1703 = vsub.f32 %v1671, %v1681
        %v1704 = vsub.f32 %v1672, %v1684
        %v1705 = vsub.f32 %v1673, %v1687
        %v1706 = vsub.f32 %v1674, %v1690
        %v1707 = vsub.f32 %v1675, %v1693
        %v1708 = vsub.f32 %v1676, %v1696
        %v1709 = vsub.f32 %v1677, %v1699
        %v1710 = vsub.f32 %v1678, %v1702
        %v1711 = vmul.f32 %v1703, 1.442695
        %v1712 = vpow.pop %v1711
        %v1713 = vmul.f32 %v1704, 1.442695
        %v1714 = vpow.pop %v1713
        %v1715 = vmul.f32 %v1705, 1.442695
        %v1716 = vpow.pop %v1715
        %v1717 = vmul.f32 %v1706, 1.442695
        %v1718 = vpow.pop %v1717
        %v1719 = vmul.f32 %v1707, 1.442695
        %v1720 = vpow.pop %v1719
        %v1721 = vmul.f32 %v1708, 1.442695
        %v1722 = vpow.pop %v1721
        %v1723 = vmul.f32 %v1709, 1.442695
        %v1724 = vpow.pop %v1723
        %v1725 = vmul.f32 %v1710, 1.442695
        %v1726 = vpow.pop %v1725
        %v1727 = vsel %vm475, %v1712, 0.0
        %1728 = vadd.xlane.f32.xlu0 %v1727
        %v1729 = vpop.xlane.xlu0 %1728
        %v1730 = vsel %vm475, %v1714, 0.0
        %1731 = vadd.xlane.f32.xlu0 %v1730
        %v1732 = vpop.xlane.xlu0 %1731
        %v1733 = vsel %vm475, %v1716, 0.0
        %1734 = vadd.xlane.f32.xlu0 %v1733
        %v1735 = vpop.xlane.xlu0 %1734
        %v1736 = vsel %vm475, %v1718, 0.0
        %1737 = vadd.xlane.f32.xlu0 %v1736
        %v1738 = vpop.xlane.xlu0 %1737
        %v1739 = vsel %vm475, %v1720, 0.0
        %1740 = vadd.xlane.f32.xlu0 %v1739
        %v1741 = vpop.xlane.xlu0 %1740
        %v1742 = vsel %vm475, %v1722, 0.0
        %1743 = vadd.xlane.f32.xlu0 %v1742
        %v1744 = vpop.xlane.xlu0 %1743
        %v1745 = vsel %vm475, %v1724, 0.0
        %1746 = vadd.xlane.f32.xlu0 %v1745
        %v1747 = vpop.xlane.xlu0 %1746
        %v1748 = vsel %vm475, %v1726, 0.0
        %1749 = vadd.xlane.f32.xlu0 %v1748
        %v1750 = vpop.xlane.xlu0 %1749
        %v1751 = vrcp.pop %v1729
        %v1752 = vrcp.pop %v1732
        %v1753 = vrcp.pop %v1735
        %v1754 = vrcp.pop %v1738
        %v1755 = vrcp.pop %v1741
        %v1756 = vrcp.pop %v1744
        %v1757 = vrcp.pop %v1747
        %v1758 = vrcp.pop %v1750
        %v1759 = vmul.f32 %v1712, %v1751
        %v1760 = vmul.f32 %v1714, %v1752
        %v1761 = vmul.f32 %v1716, %v1753
        %v1762 = vmul.f32 %v1718, %v1754
        %v1763 = vmul.f32 %v1720, %v1755
        %v1764 = vmul.f32 %v1722, %v1756
        %v1765 = vmul.f32 %v1724, %v1757
        %v1766 = vmul.f32 %v1726, %v1758
        %v1767 = vpack.c.bf16 %v1760, %v1759
        %v1768 = vpack.c.bf16 %v1762, %v1761
        %v1769 = vpack.c.bf16 %v1764, %v1763
        %v1770 = vpack.c.bf16 %v1766, %v1765
        %v1772 = vsel %vm475, %v1063, 0
        %v1775 = vsel %vm475, %v1767, 0
        %v1778 = vsel %vm475, %v1768, 0
        %v1781 = vsel %vm475, %v1769, 0
        %v1784 = vsel %vm475, %v1770, 0
        %1786 = vmatprep.subr.bf16.mxu0 0
        %1787 = vmatpush1.bf16.xpose.msra.mxu0 %v1775
        %1788 = vmatprep.subr.bf16.mxu0 0
        %1789 = vmatpush1.bf16.xpose.msra.mxu0 %v1778
        %1790 = vmatprep.subr.bf16.mxu0 0
        %1791 = vmatpush1.bf16.xpose.msra.mxu0 %v1781
        %1792 = vmatprep.subr.bf16.mxu0 0
        %1793 = vmatpush1.bf16.xpose.msra.mxu0 %v1784
        %1794 = vmatprep.subr.bf16.mxu0 0
        %1795 = vmatpush1.bf16.xpose.msra.mxu0 0
        %1796 = vmatprep.subr.bf16.mxu0 0
        %1797 = vmatpush1.bf16.xpose.msra.mxu0 0
        %1798 = vmatprep.subr.bf16.mxu0 0
        %1799 = vmatpush1.bf16.xpose.msra.mxu0 0
        %1800 = vmatprep.subr.bf16.mxu0 0
        %1801 = vmatpush1.bf16.xpose.msra.mxu0 0
        %1802 = vmatprep.subr.bf16.mxu0 0
        %1803 = vmatpush1.bf16.xpose.msra.mxu0 0
        %1804 = vmatprep.subr.bf16.mxu0 0
        %1805 = vmatpush1.bf16.xpose.msra.mxu0 0
        %1806 = vmatprep.subr.bf16.mxu0 0
        %1807 = vmatpush1.bf16.xpose.msra.mxu0 0
        %1808 = vmatprep.subr.bf16.mxu0 0
        %1809 = vmatpush1.bf16.xpose.msra.mxu0 0
        %1810 = vmatprep.subr.bf16.mxu0 0
        %1811 = vmatpush1.bf16.xpose.msra.mxu0 0
        %1812 = vmatprep.subr.bf16.mxu0 0
        %1813 = vmatpush1.bf16.xpose.msra.mxu0 0
        %1814 = vmatprep.subr.bf16.mxu0 0
        %1815 = vmatpush1.bf16.xpose.msra.mxu0 0
        %1816 = vmatprep.subr.bf16.mxu0 0
        %1817 = vmatpush1.bf16.xpose.msra.mxu0 0
        %1818 = vmatprep.mubr.bf16.mxu0 0
        %1819 = vmatmul.mubr.bf16.gmra.mrb[0].mxu0 %v1772
        %v1820 = vpop.f32.mrb[0].mxu0
        %v1821 = vadd.f32 0.0, %v1820
        %v1822 = vpop.f32.mrb[0].mxu0
        %v1823 = vpop.f32.mrb[0].mxu0
        %v1824 = vpop.f32.mrb[0].mxu0
        %1825 = vdwg.mxu0
        %v1827 = vrot.slane %v1059, 4
        %1829 = vxpose.xlu0.c.b16.start [1/8] %v1827, 128
        %1830 = vxpose.xlu0.c.b16.cont [2/8] 0, 128
        %1831 = vxpose.xlu0.c.b16.cont [3/8] 0, 128
        %1832 = vxpose.xlu0.c.b16.cont [4/8] 0, 128
        %1833 = vxpose.xlu0.c.b16.cont [5/8] 0, 128
        %1834 = vxpose.xlu0.c.b16.cont [6/8] 0, 128
        %1835 = vxpose.xlu0.c.b16.cont [7/8] 0, 128
        %1836 = vxpose.xlu0.c.b16.end [8/8] 0, 128
        %v1837 = vpop.trf.xlu0
        %v1838 = vpop.trf.xlu0
        %v1839 = vpop.trf.xlu0
        %v1840 = vpop.trf.xlu0
        %v1841 = vpop.trf.xlu0
        %v1842 = vpop.trf.xlu0
        %v1843 = vpop.trf.xlu0
        %v1844 = vpop.trf.xlu0
        %v1846 = vrot.slane %v1061, 4
        %v1848 = vsel %vm1080, %v1837, 0
        %v1851 = vsel %vm1080, %v1838, 0
        %v1854 = vsel %vm1080, %v1839, 0
        %v1857 = vsel %vm1080, %v1840, 0
        %v1860 = vsel %vm1093, %v1846, 0
        %1862 = vmatprep.subr.bf16.mxu0 0
        %1863 = vmatpush1.bf16.msra.mxu0 %v1860
        %1864 = vmatprep.subr.bf16.mxu0 0
        %1865 = vmatpush1.bf16.msra.mxu0 0
        %1866 = vmatprep.subr.bf16.mxu0 0
        %1867 = vmatpush1.bf16.msra.mxu0 0
        %1868 = vmatprep.subr.bf16.mxu0 0
        %1869 = vmatpush1.bf16.msra.mxu0 0
        %1870 = vmatprep.subr.bf16.mxu0 0
        %1871 = vmatpush1.bf16.msra.mxu0 0
        %1872 = vmatprep.subr.bf16.mxu0 0
        %1873 = vmatpush1.bf16.msra.mxu0 0
        %1874 = vmatprep.subr.bf16.mxu0 0
        %1875 = vmatpush1.bf16.msra.mxu0 0
        %1876 = vmatprep.subr.bf16.mxu0 0
        %1877 = vmatpush1.bf16.msra.mxu0 0
        %1878 = vmatprep.subr.bf16.mxu0 0
        %1879 = vmatpush1.bf16.msra.mxu0 0
        %1880 = vmatprep.subr.bf16.mxu0 0
        %1881 = vmatpush1.bf16.msra.mxu0 0
        %1882 = vmatprep.subr.bf16.mxu0 0
        %1883 = vmatpush1.bf16.msra.mxu0 0
        %1884 = vmatprep.subr.bf16.mxu0 0
        %1885 = vmatpush1.bf16.msra.mxu0 0
        %1886 = vmatprep.subr.bf16.mxu0 0
        %1887 = vmatpush1.bf16.msra.mxu0 0
        %1888 = vmatprep.subr.bf16.mxu0 0
        %1889 = vmatpush1.bf16.msra.mxu0 0
        %1890 = vmatprep.subr.bf16.mxu0 0
        %1891 = vmatpush1.bf16.msra.mxu0 0
        %1892 = vmatprep.subr.bf16.mxu0 0
        %1893 = vmatpush1.bf16.msra.mxu0 0
        %1894 = vmatprep.mubr.bf16.mxu0 0
        %1895 = vmatmul.mubr.bf16.gmra.mrb[0].mxu0 %v1848
        %v1896 = vpop.f32.mrb[0].mxu0
        %v1897 = vadd.f32 0.0, %v1896
        %v1898 = vpop.f32.mrb[0].mxu0
        %v1899 = vpop.f32.mrb[0].mxu0
        %v1900 = vadd.f32 0.0, %v1899
        %v1901 = vpop.f32.mrb[0].mxu0
        %1902 = vmatprep.mubr.bf16.mxu0 0
        %1903 = vmatmul.mubr.bf16.gmra.mrb[0].mxu0 %v1851
        %v1904 = vpop.f32.mrb[0].mxu0
        %v1905 = vadd.f32 0.0, %v1904
        %v1906 = vpop.f32.mrb[0].mxu0
        %v1907 = vpop.f32.mrb[0].mxu0
        %v1908 = vadd.f32 0.0, %v1907
        %v1909 = vpop.f32.mrb[0].mxu0
        %1910 = vmatprep.mubr.bf16.mxu0 0
        %1911 = vmatmul.mubr.bf16.gmra.mrb[0].mxu0 %v1854
        %v1912 = vpop.f32.mrb[0].mxu0
        %v1913 = vadd.f32 0.0, %v1912
        %v1914 = vpop.f32.mrb[0].mxu0
        %v1915 = vpop.f32.mrb[0].mxu0
        %v1916 = vadd.f32 0.0, %v1915
        %v1917 = vpop.f32.mrb[0].mxu0
        %1918 = vmatprep.mubr.bf16.mxu0 0
        %1919 = vmatmul.mubr.bf16.gmra.mrb[0].mxu0 %v1857
        %v1920 = vpop.f32.mrb[0].mxu0
        %v1921 = vadd.f32 0.0, %v1920
        %v1922 = vpop.f32.mrb[0].mxu0
        %v1923 = vpop.f32.mrb[0].mxu0
        %v1924 = vadd.f32 0.0, %v1923
        %v1925 = vpop.f32.mrb[0].mxu0
        %1926 = vdwg.mxu0
        %v1927 = vmul.f32 %v1897, 0.35355338
        %v1928 = vmul.f32 %v1900, 0.35355338
        %v1929 = vmul.f32 %v1905, 0.35355338
        %v1930 = vmul.f32 %v1908, 0.35355338
        %v1931 = vmul.f32 %v1913, 0.35355338
        %v1932 = vmul.f32 %v1916, 0.35355338
        %v1933 = vmul.f32 %v1921, 0.35355338
        %v1934 = vmul.f32 %v1924, 0.35355338
        %v1935 = vsel %vm475, %v1927, -inf
        %1936 = vmax.xlane.f32.xlu0 %v1935
        %v1937 = vpop.xlane.xlu0 %1936
        %v1938 = vsel %vm475, %v1928, -inf
        %1939 = vmax.xlane.f32.xlu0 %v1938
        %v1940 = vpop.xlane.xlu0 %1939
        %v1941 = vsel %vm475, %v1929, -inf
        %1942 = vmax.xlane.f32.xlu0 %v1941
        %v1943 = vpop.xlane.xlu0 %1942
        %v1944 = vsel %vm475, %v1930, -inf
        %1945 = vmax.xlane.f32.xlu0 %v1944
        %v1946 = vpop.xlane.xlu0 %1945
        %v1947 = vsel %vm475, %v1931, -inf
        %1948 = vmax.xlane.f32.xlu0 %v1947
        %v1949 = vpop.xlane.xlu0 %1948
        %v1950 = vsel %vm475, %v1932, -inf
        %1951 = vmax.xlane.f32.xlu0 %v1950
        %v1952 = vpop.xlane.xlu0 %1951
        %v1953 = vsel %vm475, %v1933, -inf
        %1954 = vmax.xlane.f32.xlu0 %v1953
        %v1955 = vpop.xlane.xlu0 %1954
        %v1956 = vsel %vm475, %v1934, -inf
        %1957 = vmax.xlane.f32.xlu0 %v1956
        %v1958 = vpop.xlane.xlu0 %1957
        %v1959 = vsub.f32 %v1927, %v1937
        %v1960 = vsub.f32 %v1928, %v1940
        %v1961 = vsub.f32 %v1929, %v1943
        %v1962 = vsub.f32 %v1930, %v1946
        %v1963 = vsub.f32 %v1931, %v1949
        %v1964 = vsub.f32 %v1932, %v1952
        %v1965 = vsub.f32 %v1933, %v1955
        %v1966 = vsub.f32 %v1934, %v1958
        %v1967 = vmul.f32 %v1959, 1.442695
        %v1968 = vpow.pop %v1967
        %v1969 = vmul.f32 %v1960, 1.442695
        %v1970 = vpow.pop %v1969
        %v1971 = vmul.f32 %v1961, 1.442695
        %v1972 = vpow.pop %v1971
        %v1973 = vmul.f32 %v1962, 1.442695
        %v1974 = vpow.pop %v1973
        %v1975 = vmul.f32 %v1963, 1.442695
        %v1976 = vpow.pop %v1975
        %v1977 = vmul.f32 %v1964, 1.442695
        %v1978 = vpow.pop %v1977
        %v1979 = vmul.f32 %v1965, 1.442695
        %v1980 = vpow.pop %v1979
        %v1981 = vmul.f32 %v1966, 1.442695
        %v1982 = vpow.pop %v1981
        %v1983 = vsel %vm475, %v1968, 0.0
        %1984 = vadd.xlane.f32.xlu0 %v1983
        %v1985 = vpop.xlane.xlu0 %1984
        %v1986 = vsel %vm475, %v1970, 0.0
        %1987 = vadd.xlane.f32.xlu0 %v1986
        %v1988 = vpop.xlane.xlu0 %1987
        %v1989 = vsel %vm475, %v1972, 0.0
        %1990 = vadd.xlane.f32.xlu0 %v1989
        %v1991 = vpop.xlane.xlu0 %1990
        %v1992 = vsel %vm475, %v1974, 0.0
        %1993 = vadd.xlane.f32.xlu0 %v1992
        %v1994 = vpop.xlane.xlu0 %1993
        %v1995 = vsel %vm475, %v1976, 0.0
        %1996 = vadd.xlane.f32.xlu0 %v1995
        %v1997 = vpop.xlane.xlu0 %1996
        %v1998 = vsel %vm475, %v1978, 0.0
        %1999 = vadd.xlane.f32.xlu0 %v1998
        %v2000 = vpop.xlane.xlu0 %1999
        %v2001 = vsel %vm475, %v1980, 0.0
        %2002 = vadd.xlane.f32.xlu0 %v2001
        %v2003 = vpop.xlane.xlu0 %2002
        %v2004 = vsel %vm475, %v1982, 0.0
        %2005 = vadd.xlane.f32.xlu0 %v2004
        %v2006 = vpop.xlane.xlu0 %2005
        %v2007 = vrcp.pop %v1985
        %v2008 = vrcp.pop %v1988
        %v2009 = vrcp.pop %v1991
        %v2010 = vrcp.pop %v1994
        %v2011 = vrcp.pop %v1997
        %v2012 = vrcp.pop %v2000
        %v2013 = vrcp.pop %v2003
        %v2014 = vrcp.pop %v2006
        %v2015 = vmul.f32 %v1968, %v2007
        %v2016 = vmul.f32 %v1970, %v2008
        %v2017 = vmul.f32 %v1972, %v2009
        %v2018 = vmul.f32 %v1974, %v2010
        %v2019 = vmul.f32 %v1976, %v2011
        %v2020 = vmul.f32 %v1978, %v2012
        %v2021 = vmul.f32 %v1980, %v2013
        %v2022 = vmul.f32 %v1982, %v2014
        %v2023 = vpack.c.bf16 %v2016, %v2015
        %v2024 = vpack.c.bf16 %v2018, %v2017
        %v2025 = vpack.c.bf16 %v2020, %v2019
        %v2026 = vpack.c.bf16 %v2022, %v2021
        %v2028 = vrot.slane %v1063, 4
        %v2030 = vsel %vm475, %v2028, 0
        %v2033 = vsel %vm475, %v2023, 0
        %v2036 = vsel %vm475, %v2024, 0
        %v2039 = vsel %vm475, %v2025, 0
        %v2042 = vsel %vm475, %v2026, 0
        %2044 = vmatprep.subr.bf16.mxu0 0
        %2045 = vmatpush1.bf16.xpose.msra.mxu0 %v2033
        %2046 = vmatprep.subr.bf16.mxu0 0
        %2047 = vmatpush1.bf16.xpose.msra.mxu0 %v2036
        %2048 = vmatprep.subr.bf16.mxu0 0
        %2049 = vmatpush1.bf16.xpose.msra.mxu0 %v2039
        %2050 = vmatprep.subr.bf16.mxu0 0
        %2051 = vmatpush1.bf16.xpose.msra.mxu0 %v2042
        %2052 = vmatprep.subr.bf16.mxu0 0
        %2053 = vmatpush1.bf16.xpose.msra.mxu0 0
        %2054 = vmatprep.subr.bf16.mxu0 0
        %2055 = vmatpush1.bf16.xpose.msra.mxu0 0
        %2056 = vmatprep.subr.bf16.mxu0 0
        %2057 = vmatpush1.bf16.xpose.msra.mxu0 0
        %2058 = vmatprep.subr.bf16.mxu0 0
        %2059 = vmatpush1.bf16.xpose.msra.mxu0 0
        %2060 = vmatprep.subr.bf16.mxu0 0
        %2061 = vmatpush1.bf16.xpose.msra.mxu0 0
        %2062 = vmatprep.subr.bf16.mxu0 0
        %2063 = vmatpush1.bf16.xpose.msra.mxu0 0
        %2064 = vmatprep.subr.bf16.mxu0 0
        %2065 = vmatpush1.bf16.xpose.msra.mxu0 0
        %2066 = vmatprep.subr.bf16.mxu0 0
        %2067 = vmatpush1.bf16.xpose.msra.mxu0 0
        %2068 = vmatprep.subr.bf16.mxu0 0
        %2069 = vmatpush1.bf16.xpose.msra.mxu0 0
        %2070 = vmatprep.subr.bf16.mxu0 0
        %2071 = vmatpush1.bf16.xpose.msra.mxu0 0
        %2072 = vmatprep.subr.bf16.mxu0 0
        %2073 = vmatpush1.bf16.xpose.msra.mxu0 0
        %2074 = vmatprep.subr.bf16.mxu0 0
        %2075 = vmatpush1.bf16.xpose.msra.mxu0 0
        %2076 = vmatprep.mubr.bf16.mxu0 0
        %2077 = vmatmul.mubr.bf16.gmra.mrb[0].mxu0 %v2030
        %v2078 = vpop.f32.mrb[0].mxu0
        %v2079 = vadd.f32 0.0, %v2078
        %v2080 = vpop.f32.mrb[0].mxu0
        %v2081 = vpop.f32.mrb[0].mxu0
        %v2082 = vpop.f32.mrb[0].mxu0
        %2083 = vdwg.mxu0
        %v2084 = vld [vmem:[%s8] sm:$0xf]
        %v2085 = vld [vmem:[%s8 + $0x4] sm:$0xf]
        %v2086 = vld [vmem:[%s8 + $0x8] sm:$0xf]
        %v2087 = vld [vmem:[%s8 + $0xc] sm:$0xf]
        %v2088 = vld [vmem:[%s8 + $0x10] sm:$0xf]
        %v2089 = vld [vmem:[%s8 + $0x14] sm:$0xf]
        %v2090 = vld [vmem:[%s8 + $0x18] sm:$0xf]
        %v2091 = vld [vmem:[%s8 + $0x1c] sm:$0xf]
        %v2092 = vpack.c.bf16 %v1570, %v1312
        %v2093 = vpack.c.bf16 %v2079, %v1821
        %v2094 = vld [vmem:[%s9] sm:$0xff]
        %v2095 = vld [vmem:[%s9 + $0x8] sm:$0xff]
        %v2096 = vld [vmem:[%s9 + $0x10] sm:$0xff]
        %v2097 = vld [vmem:[%s9 + $0x18] sm:$0xff]
        %v2098 = vld [vmem:[%s9 + $0x20] sm:$0xff]
        %v2099 = vld [vmem:[%s9 + $0x28] sm:$0xff]
        %v2100 = vld [vmem:[%s9 + $0x30] sm:$0xff]
        %v2101 = vld [vmem:[%s9 + $0x38] sm:$0xff]
        %2103 = vset.pattern.permute.xlu0 0
        %2104 = vperm.xlu0 %2103, %v2094
        %v2105 = vpop.permute.xlu0 %2104
        %2108 = vset.pattern.permute.xlu0 0
        %2109 = vperm.xlu0 %2108, %v2095
        %v2110 = vpop.permute.xlu0 %2109
        %2113 = vset.pattern.permute.xlu0 0
        %2114 = vperm.xlu0 %2113, %v2096
        %v2115 = vpop.permute.xlu0 %2114
        %2118 = vset.pattern.permute.xlu0 0
        %2119 = vperm.xlu0 %2118, %v2097
        %v2120 = vpop.permute.xlu0 %2119
        %2123 = vset.pattern.permute.xlu0 0
        %2124 = vperm.xlu0 %2123, %v2098
        %v2125 = vpop.permute.xlu0 %2124
        %2128 = vset.pattern.permute.xlu0 0
        %2129 = vperm.xlu0 %2128, %v2099
        %v2130 = vpop.permute.xlu0 %2129
        %2133 = vset.pattern.permute.xlu0 0
        %2134 = vperm.xlu0 %2133, %v2100
        %v2135 = vpop.permute.xlu0 %2134
        %2138 = vset.pattern.permute.xlu0 0
        %2139 = vperm.xlu0 %2138, %v2101
        %v2140 = vpop.permute.xlu0 %2139
        %v2150 = vunpack.c.l.b16 %v2084
        %v2151 = vunpack.c.l.b16 %v2085
        %v2152 = vunpack.c.l.b16 %v2086
        %v2153 = vunpack.c.l.b16 %v2087
        %v2154 = vunpack.c.l.b16 %v2088
        %v2155 = vunpack.c.l.b16 %v2089
        %v2156 = vunpack.c.l.b16 %v2090
        %v2157 = vunpack.c.l.b16 %v2091
        %v2158 = vpack.c.b16 %v2151, %v2150
        %v2159 = vpack.c.b16 %v2153, %v2152
        %v2160 = vpack.c.b16 %v2155, %v2154
        %v2161 = vpack.c.b16 %v2157, %v2156
        %vm2162 = vcmask 261120
        %v2164 = vsel %vm2162, %v2158, 0
        %v2167 = vsel %vm2162, %v2159, 0
        %v2170 = vsel %vm2162, %v2160, 0
        %v2173 = vsel %vm2162, %v2161, 0
        %2175 = vmatprep.subr.bf16.mxu0 0
        %2176 = vmatpush1.bf16.msra.mxu0 %v2092
        %2177 = vmatprep.subr.bf16.mxu0 0
        %2178 = vmatpush1.bf16.msra.mxu0 %v2093
        %2179 = vmatprep.subr.bf16.mxu0 0
        %2180 = vmatpush1.bf16.msra.mxu0 0
        %2181 = vmatprep.subr.bf16.mxu0 0
        %2182 = vmatpush1.bf16.msra.mxu0 0
        %2183 = vmatprep.subr.bf16.mxu0 0
        %2184 = vmatpush1.bf16.msra.mxu0 0
        %2185 = vmatprep.subr.bf16.mxu0 0
        %2186 = vmatpush1.bf16.msra.mxu0 0
        %2187 = vmatprep.subr.bf16.mxu0 0
        %2188 = vmatpush1.bf16.msra.mxu0 0
        %2189 = vmatprep.subr.bf16.mxu0 0
        %2190 = vmatpush1.bf16.msra.mxu0 0
        %2191 = vmatprep.subr.bf16.mxu0 0
        %2192 = vmatpush1.bf16.msra.mxu0 0
        %2193 = vmatprep.subr.bf16.mxu0 0
        %2194 = vmatpush1.bf16.msra.mxu0 0
        %2195 = vmatprep.subr.bf16.mxu0 0
        %2196 = vmatpush1.bf16.msra.mxu0 0
        %2197 = vmatprep.subr.bf16.mxu0 0
        %2198 = vmatpush1.bf16.msra.mxu0 0
        %2199 = vmatprep.subr.bf16.mxu0 0
        %2200 = vmatpush1.bf16.msra.mxu0 0
        %2201 = vmatprep.subr.bf16.mxu0 0
        %2202 = vmatpush1.bf16.msra.mxu0 0
        %2203 = vmatprep.subr.bf16.mxu0 0
        %2204 = vmatpush1.bf16.msra.mxu0 0
        %2205 = vmatprep.subr.bf16.mxu0 0
        %2206 = vmatpush1.bf16.msra.mxu0 0
        %2207 = vmatprep.mubr.bf16.mxu0 0
        %2208 = vmatmul.mubr.bf16.gmra.mrb[0].mxu0 %v2164
        %v2209 = vpop.f32.mrb[0].mxu0
        %v2210 = vadd.f32 %v2105, %v2209
        %v2211 = vpop.f32.mrb[0].mxu0
        %v2212 = vpop.f32.mrb[0].mxu0
        %v2213 = vadd.f32 %v2110, %v2212
        %v2214 = vpop.f32.mrb[0].mxu0
        %2215 = vmatprep.mubr.bf16.mxu0 0
        %2216 = vmatmul.mubr.bf16.gmra.mrb[0].mxu0 %v2167
        %v2217 = vpop.f32.mrb[0].mxu0
        %v2218 = vadd.f32 %v2115, %v2217
        %v2219 = vpop.f32.mrb[0].mxu0
        %v2220 = vpop.f32.mrb[0].mxu0
        %v2221 = vadd.f32 %v2120, %v2220
        %v2222 = vpop.f32.mrb[0].mxu0
        %2223 = vmatprep.mubr.bf16.mxu0 0
        %2224 = vmatmul.mubr.bf16.gmra.mrb[0].mxu0 %v2170
        %v2225 = vpop.f32.mrb[0].mxu0
        %v2226 = vadd.f32 %v2125, %v2225
        %v2227 = vpop.f32.mrb[0].mxu0
        %v2228 = vpop.f32.mrb[0].mxu0
        %v2229 = vadd.f32 %v2130, %v2228
        %v2230 = vpop.f32.mrb[0].mxu0
        %2231 = vmatprep.mubr.bf16.mxu0 0
        %2232 = vmatmul.mubr.bf16.gmra.mrb[0].mxu0 %v2173
        %v2233 = vpop.f32.mrb[0].mxu0
        %v2234 = vadd.f32 %v2135, %v2233
        %v2235 = vpop.f32.mrb[0].mxu0
        %v2236 = vpop.f32.mrb[0].mxu0
        %v2237 = vadd.f32 %v2140, %v2236
        %v2238 = vpop.f32.mrb[0].mxu0
        %2239 = vdwg.mxu0
        %v2240 = vadd.f32 %v402, %v2210
        %v2241 = vadd.f32 %v403, %v2213
        %v2242 = vadd.f32 %v404, %v2218
        %v2243 = vadd.f32 %v405, %v2221
        %v2244 = vadd.f32 %v406, %v2226
        %v2245 = vadd.f32 %v407, %v2229
        %v2246 = vadd.f32 %v408, %v2234
        %v2247 = vadd.f32 %v409, %v2237
        %s2248 = scalar_lea.vmem %s391, %s400
        %2249 = vst.msk [vmem:[%s2248] sm:$0xff] %vm475, %v2240
        %2250 = vst.msk [vmem:[%s2248 + $0x8] sm:$0xff] %vm475, %v2241
        %2251 = vst.msk [vmem:[%s2248 + $0x10] sm:$0xff] %vm475, %v2242
        %2252 = vst.msk [vmem:[%s2248 + $0x18] sm:$0xff] %vm475, %v2243
        %2253 = vst.msk [vmem:[%s2248 + $0x20] sm:$0xff] %vm475, %v2244
        %2254 = vst.msk [vmem:[%s2248 + $0x28] sm:$0xff] %vm475, %v2245
        %2255 = vst.msk [vmem:[%s2248 + $0x30] sm:$0xff] %vm475, %v2246
        %2256 = vst.msk [vmem:[%s2248 + $0x38] sm:$0xff] %vm475, %v2247
      $region65: #{lawin_attn_forward.1} parent=59 // loop_footer
        %s399 = sadd.s32 1, %s395
      $region66: #{lawin_attn_forward.1} parent=59 // loop_footer_branch
        %394 = sbr.rel target = $region62
      $region67: #{lawin_attn_forward.1} parent=59 // loop_exit
        _
      %s2257 = smul.u32 4, %s21
      %p2258 = scmp.lt.s32.totalorder %s2257, 7
      %s2259 = scalar_select %p2258, %s2257, 7
      %s2260 = smul.addr %s2259, 8
      %s2261 = smul.addr %s2260, 8
      %s2262 = scalar_lea.vmem %s10, %s2261
      // Predicated region
      $region68: #{lawin_attn_forward.1} parent=59 // pred_check
        %p2263 = pneg %p259
      $region69: #{lawin_attn_forward.1} parent=59 // pred_check_branch
        %2265 = sbr.rel (%p2263) target = $region71
      $region70: #{lawin_attn_forward.1} parent=59 // pred_region
        %s2266 = smul.u32 4, %s21
      $region71: #{lawin_attn_forward.1} parent=59 // pred_fallthru
        _
    $region60: #{lawin_attn_forward.1} parent=5 // pred_fallthru
      _
    %p2267 = scmp.le.s32.totalorder 2, %s16
    // Predicated region
    $region72: #{lawin_attn_forward.1} parent=5 // pred_check
      %p2268 = pneg %p2267
    $region73: #{lawin_attn_forward.1} parent=5 // pred_check_branch
      %2270 = sbr.rel (%p2268) target = $region75
    $region74: #{lawin_attn_forward.1} parent=5 // pred_region
      %s2271 = ssub.s32 %s16, 2
      // Predicated region
      $region76: #{lawin_attn_forward.1} parent=74 // pred_check
        %p2272 = pneg %p265
      $region77: #{lawin_attn_forward.1} parent=74 // pred_check_branch
        %2274 = sbr.rel (%p2272) target = $region79
      $region78: #{lawin_attn_forward.1} parent=74 // pred_region
        %s2275 = smul.u32 4, %s22
        %p2276 = scmp.lt.s32.totalorder %s2275, 7
        %s2277 = scalar_select %p2276, %s2275, 7
        %s2278 = smul.addr %s2277, 8
        %s2279 = smul.addr %s2278, 8
        %s2280 = scalar_lea.vmem %s10, %s2279
      $region79: #{lawin_attn_forward.1} parent=74 // pred_fallthru
        _
    $region75: #{lawin_attn_forward.1} parent=5 // pred_fallthru
      _
  $region6: #{lawin_attn_forward.1} parent=0 // loop_footer
    %s20 = sadd.s32 1, %s16
  $region7: #{lawin_attn_forward.1} parent=0 // loop_footer_branch
    %15 = sbr.rel target = $region3
  $region8: #{lawin_attn_forward.1} parent=0 // loop_exit
    _

</llo_original>
